<compile_context>
chip_gen: v6e
topology: v6e:2x2x1
jax: 0.10.0
libtpu: 0.0.40
codegen_flags: <defaults>
</compile_context>

<pallas_src>
import math

import jax
import jax.numpy as jnp
from jax.experimental import pallas as pl
from jax.experimental.pallas import tpu as pltpu

# ----------------------------- sizes -----------------------------------------
USER_EMB, OCC_EMB, MOVIE_EMB = 16, 8, 16
USER_T, MOVIE_T, GENRE_T, VISION_T = 32, 32, 16, 32
BACKBONE_FEATS = 1280                                   # efficientnet_b0 num_features
FUSION_IN = USER_T + MOVIE_T + GENRE_T + VISION_T       # 112
FUSION_HID = 64

NUM_USERS, NUM_MOVIES, NUM_OCCUPATIONS, NUM_GENRES = 10, 12, 5, 18

USER_IN = USER_EMB + 1 + 1 + OCC_EMB                    # 26
MOVIE_IN = MOVIE_EMB + 1                                # 17
GENRE_IN = NUM_GENRES                                   # 18
POOL_IN = 3
SCALAR_IN = USER_IN + MOVIE_IN + GENRE_IN + POOL_IN     # 64  (exactly sublane*8)
LANE = 128
TOWER_PAD = 128                                         # lane-padded tower slab width
COMB_W = TOWER_PAD + BACKBONE_FEATS                     # 1408 = 11 * 128


def _round_up(x, m):
    return (x + m - 1) // m * m


# ----------------------------- kernel ----------------------------------------
def recommender_kernel(x_ref, w_all_ref, b_all_ref, wv_ref, bv_ref,
                       wf1t_ref, wf1v_ref, bf1_ref, wf2_ref, bf2_ref, out_ref):
    f32 = jnp.float32
    relu = lambda v: jnp.maximum(v, 0.0)

    # Single MXU pass: block-diagonal [user|movie|genre towers] (lanes 0..127)
    # plus backbone stand-in 3 -> 1280 (lanes 128..1407). ReLU applies to both.
    comb = relu(jnp.dot(x_ref[...], w_all_ref[...], preferred_element_type=f32)
                + b_all_ref[...])                        # (TB, 1408)
    slab = comb[:, :TOWER_PAD]                           # (TB, 128): [uo|mo|go|0]
    feat = comb[:, TOWER_PAD:]                           # (TB, 1280)

    # Vision tower: Linear(1280 -> 32) + ReLU, zero-padded to 128 output lanes.
    vo = relu(jnp.dot(feat, wv_ref[...], preferred_element_type=f32) + bv_ref[...])

    # Fusion Linear(112 -> 64) as two 128-aligned dots over the padded slabs.
    h = relu(jnp.dot(slab, wf1t_ref[...], preferred_element_type=f32)
             + jnp.dot(vo, wf1v_ref[...], preferred_element_type=f32)
             + bf1_ref[...])                             # (TB, 64)

    # Dropout(0.2) -> identity (eval). Final Linear(64 -> 1) padded to 128 lanes
    # so the output store is lane-dense; column 0 is the real score.
    out_ref[...] = (jnp.dot(h, wf2_ref[...], preferred_element_type=f32)
                    + bf2_ref[...])


# ----------------------------- weight packing ---------------------------------
def pack_params(p):
    """Pack per-layer weights into lane-aligned, block-diagonal kernel weights."""
    f32 = jnp.float32
    u0, u1 = 0, USER_IN                                  # rows 0..25
    m0, m1 = u1, u1 + MOVIE_IN                           # rows 26..42
    g0, g1 = m1, m1 + GENRE_IN                           # rows 43..60
    p0, p1 = g1, g1 + POOL_IN                            # rows 61..63

    w_all = jnp.zeros((SCALAR_IN, COMB_W), f32)
    w_all = w_all.at[u0:u1, 0:USER_T].set(p["wu"])
    w_all = w_all.at[m0:m1, USER_T:USER_T + MOVIE_T].set(p["wm"])
    w_all = w_all.at[g0:g1, USER_T + MOVIE_T:USER_T + MOVIE_T + GENRE_T].set(p["wg"])
    w_all = w_all.at[p0:p1, TOWER_PAD:].set(p["wbb"])

    b_all = jnp.zeros((1, COMB_W), f32)
    b_all = b_all.at[:, 0:USER_T].set(p["bu"])
    b_all = b_all.at[:, USER_T:USER_T + MOVIE_T].set(p["bm"])
    b_all = b_all.at[:, USER_T + MOVIE_T:USER_T + MOVIE_T + GENRE_T].set(p["bg"])
    b_all = b_all.at[:, TOWER_PAD:].set(p["bbb"])

    wv_pad = jnp.zeros((BACKBONE_FEATS, LANE), f32).at[:, 0:VISION_T].set(p["wv"])
    bv_pad = jnp.zeros((1, LANE), f32).at[:, 0:VISION_T].set(p["bv"])

    ntow = USER_T + MOVIE_T + GENRE_T                    # 80
    wf1_slab = jnp.zeros((TOWER_PAD, FUSION_HID), f32).at[0:ntow, :].set(
        p["wf1"][0:ntow, :])
    wf1_vis = jnp.zeros((LANE, FUSION_HID), f32).at[0:VISION_T, :].set(
        p["wf1"][ntow:ntow + VISION_T, :])
    bf1 = p["bf1"]

    wf2_pad = jnp.zeros((FUSION_HID, LANE), f32).at[:, 0:1].set(p["wf2"])
    bf2_pad = jnp.zeros((1, LANE), f32).at[:, 0:1].set(p["bf2"])

    return dict(w_all=w_all, b_all=b_all, wv_pad=wv_pad, bv_pad=bv_pad,
                wf1_slab=wf1_slab, wf1_vis=wf1_vis, bf1=bf1,
                wf2_pad=wf2_pad, bf2_pad=bf2_pad)


# ----------------------------- wrapper ----------------------------------------
def multimodal_recommender(params, user_features, movie_features,
                           genre_features, poster_image, *, block_b=128):
    B = user_features.shape[0]

    # Glue (plain JAX): embedding gathers, global-avg-pool (hoisted out of the
    # kernel), and concat of everything into one 64-wide scalar slab.
    user_idx = user_features[:, 0].astype(jnp.int32)
    occ_idx = user_features[:, 3].astype(jnp.int32)
    movie_idx = movie_features[:, 0].astype(jnp.int32)
    user_emb = jnp.take(params["user_embedding"], user_idx, axis=0)
    occ_emb = jnp.take(params["occupation_embedding"], occ_idx, axis=0)
    movie_emb = jnp.take(params["movie_embedding"], movie_idx, axis=0)
    pooled = jnp.mean(poster_image, axis=(2, 3))                       # (B, 3)

    scalar_in = jnp.concatenate(
        [user_emb, user_features[:, 1:2], user_features[:, 2:3], occ_emb,
         movie_emb, movie_features[:, 1:2], genre_features, pooled],
        axis=1).astype(jnp.float32)                                    # (B, 64)

    # Batch tile: multiple of 8 sublanes; grid over the padded batch.
    TB = min(block_b, _round_up(B, 8))
    B_pad = _round_up(B, TB)
    if B_pad != B:
        scalar_in = jnp.pad(scalar_in, ((0, B_pad - B), (0, 0)))

    kp = pack_params(params)

    flops = 2 * B_pad * (SCALAR_IN * COMB_W + BACKBONE_FEATS * LANE
                         + 2 * TOWER_PAD * FUSION_HID + FUSION_HID * LANE)
    bytes_accessed = 4 * (B_pad * SCALAR_IN + B_pad * LANE
                          + SCALAR_IN * COMB_W + COMB_W
                          + BACKBONE_FEATS * LANE + LANE
                          + 2 * TOWER_PAD * FUSION_HID + FUSION_HID
                          + FUSION_HID * LANE + LANE)

    out = pl.pallas_call(
        recommender_kernel,
        out_shape=jax.ShapeDtypeStruct((B_pad, LANE), jnp.float32),
        grid_spec=pltpu.PrefetchScalarGridSpec(
            num_scalar_prefetch=0,
            grid=(B_pad // TB,),
            in_specs=[
                pl.BlockSpec((TB, SCALAR_IN), lambda i: (i, 0)),          # x
                pl.BlockSpec((SCALAR_IN, COMB_W), lambda i: (0, 0)),      # w_all
                pl.BlockSpec((1, COMB_W), lambda i: (0, 0)),              # b_all
                pl.BlockSpec((BACKBONE_FEATS, LANE), lambda i: (0, 0)),   # wv_pad
                pl.BlockSpec((1, LANE), lambda i: (0, 0)),                # bv_pad
                pl.BlockSpec((TOWER_PAD, FUSION_HID), lambda i: (0, 0)),  # wf1_slab
                pl.BlockSpec((LANE, FUSION_HID), lambda i: (0, 0)),       # wf1_vis
                pl.BlockSpec((1, FUSION_HID), lambda i: (0, 0)),          # bf1
                pl.BlockSpec((FUSION_HID, LANE), lambda i: (0, 0)),       # wf2_pad
                pl.BlockSpec((1, LANE), lambda i: (0, 0)),                # bf2_pad
            ],
            out_specs=pl.BlockSpec((TB, LANE), lambda i: (i, 0)),
        ),
        compiler_params=pltpu.CompilerParams(
            dimension_semantics=("parallel",)),
        cost_estimate=pl.CostEstimate(flops=flops, transcendentals=0,
                                      bytes_accessed=bytes_accessed),
    )(scalar_in, kp["w_all"], kp["b_all"], kp["wv_pad"], kp["bv_pad"],
      kp["wf1_slab"], kp["wf1_vis"], kp["bf1"], kp["wf2_pad"], kp["bf2_pad"])

    return out[:B, 0]                                                   # squeeze(1)


# ----------------------------- params -----------------------------------------
def _linear(key, fan_in, fan_out):
    k1, k2 = jax.random.split(key)
    bound = 1.0 / math.sqrt(fan_in)
    w = jax.random.uniform(k1, (fan_in, fan_out), jnp.float32, -bound, bound)
    b = jax.random.uniform(k2, (1, fan_out), jnp.float32, -bound, bound)
    return w, b


def init_params(key):
    keys = jax.random.split(key, 12)
    p = {}
    p["user_embedding"] = jax.random.normal(keys[0], (NUM_USERS, USER_EMB), jnp.float32)
    p["occupation_embedding"] = jax.random.normal(keys[1], (NUM_OCCUPATIONS, OCC_EMB), jnp.float32)
    p["movie_embedding"] = jax.random.normal(keys[2], (NUM_MOVIES, MOVIE_EMB), jnp.float32)
    p["wu"], p["bu"] = _linear(keys[3], USER_IN, USER_T)                    # 26 -> 32
    p["wm"], p["bm"] = _linear(keys[4], MOVIE_IN, MOVIE_T)                  # 17 -> 32
    p["wg"], p["bg"] = _linear(keys[5], GENRE_IN, GENRE_T)                  # 18 -> 16
    p["wbb"], p["bbb"] = _linear(keys[6], 3, BACKBONE_FEATS)                # backbone stand-in
    p["wv"], p["bv"] = _linear(keys[7], BACKBONE_FEATS, VISION_T)           # 1280 -> 32
    p["wf1"], p["bf1"] = _linear(keys[8], FUSION_IN, FUSION_HID)            # 112 -> 64
    p["wf2"], p["bf2"] = _linear(keys[9], FUSION_HID, 1)                    # 64 -> 1
    return p


# ----------------------------- reference (pure JAX) ---------------------------
def reference(params, user_features, movie_features, genre_features, poster_image):
    relu = lambda v: jnp.maximum(v, 0.0)
    user_idx = user_features[:, 0].astype(jnp.int32)
    occ_idx = user_features[:, 3].astype(jnp.int32)
    user_in = jnp.concatenate([jnp.take(params["user_embedding"], user_idx, 0),
                               user_features[:, 1:2], user_features[:, 2:3],
                               jnp.take(params["occupation_embedding"], occ_idx, 0)], 1)
    movie_idx = movie_features[:, 0].astype(jnp.int32)
    movie_in = jnp.concatenate([jnp.take(params["movie_embedding"], movie_idx, 0),
                                movie_features[:, 1:2]], 1)
    uo = relu(user_in @ params["wu"] + params["bu"])
    mo = relu(movie_in @ params["wm"] + params["bm"])
    go = relu(genre_features @ params["wg"] + params["bg"])
    pooled = jnp.mean(poster_image, axis=(2, 3))
    feat = relu(pooled @ params["wbb"] + params["bbb"])
    vo = relu(feat @ params["wv"] + params["bv"])
    fused = jnp.concatenate([uo, mo, go, vo], 1)
    h = relu(fused @ params["wf1"] + params["bf1"])
    return (h @ params["wf2"] + params["bf2"])[:, 0]


# ----------------------------- main --------------------------------------------
if __name__ == "__main__":
    key = jax.random.PRNGKey(0)
    k_p, k_u, k_m, k_g, k_img, k_id = jax.random.split(key, 6)

    B, C, H, W = 4, 3, 16, 16
    params = init_params(k_p)

    uidx = jax.random.randint(k_id, (B,), 0, NUM_USERS).astype(jnp.float32)
    oidx = jax.random.randint(jax.random.fold_in(k_id, 1), (B,), 0, NUM_OCCUPATIONS).astype(jnp.float32)
    midx = jax.random.randint(jax.random.fold_in(k_id, 2), (B,), 0, NUM_MOVIES).astype(jnp.float32)
    gender = jax.random.uniform(k_u, (B,))
    age = jax.random.uniform(jax.random.fold_in(k_u, 1), (B,)) * 50.0
    year = jax.random.uniform(k_m, (B,))
    user_features = jnp.stack([uidx, gender, age, oidx], axis=1)          # (B, 4)
    movie_features = jnp.stack([midx, year], axis=1)                      # (B, 2)
    genre_features = (jax.random.uniform(k_g, (B, NUM_GENRES)) > 0.5).astype(jnp.float32)
    poster_image = jax.random.normal(k_img, (B, C, H, W), jnp.float32)    # NCHW

    out = multimodal_recommender(params, user_features, movie_features,
                                 genre_features, poster_image)
    out = jax.block_until_ready(out)

    ref = reference(params, user_features, movie_features, genre_features, poster_image)
    assert out.shape == (B,)
    assert jnp.allclose(out, ref, atol=1e-4, rtol=1e-4), (out, ref)
    print("KERNEL_OK")
</pallas_src>

<mosaic_0001>
module attributes {stable_mosaic.version = 11 : i64} {
  func.func @recommender_kernel(%arg0: i32, %arg1: memref<8x64xf32, #tpu.memory_space<vmem>>, %arg2: memref<64x1408xf32, #tpu.memory_space<vmem>>, %arg3: memref<1x1408xf32, #tpu.memory_space<vmem>>, %arg4: memref<1280x128xf32, #tpu.memory_space<vmem>>, %arg5: memref<1x128xf32, #tpu.memory_space<vmem>>, %arg6: memref<128x64xf32, #tpu.memory_space<vmem>>, %arg7: memref<128x64xf32, #tpu.memory_space<vmem>>, %arg8: memref<1x64xf32, #tpu.memory_space<vmem>>, %arg9: memref<64x128xf32, #tpu.memory_space<vmem>>, %arg10: memref<1x128xf32, #tpu.memory_space<vmem>>, %arg11: memref<8x128xf32, #tpu.memory_space<vmem>>) attributes {dimension_semantics = [#tpu.dimension_semantics<parallel>], iteration_bounds = array<i64: 1>, scalar_prefetch = 0 : i64, scratch_operands = 0 : i64, tpu.core_type = #tpu.core_type<tc>, window_params = [{transform_indices = @transform_0, window_bounds = array<i64: 8, 64>}, {pipeline_mode = #tpu.pipeline_mode<synchronous>, transform_indices = @transform_1, window_bounds = array<i64: 64, 1408>}, {pipeline_mode = #tpu.pipeline_mode<synchronous>, transform_indices = @transform_2, window_bounds = array<i64: 1, 1408>}, {pipeline_mode = #tpu.pipeline_mode<synchronous>, transform_indices = @transform_3, window_bounds = array<i64: 1280, 128>}, {pipeline_mode = #tpu.pipeline_mode<synchronous>, transform_indices = @transform_4, window_bounds = array<i64: 1, 128>}, {pipeline_mode = #tpu.pipeline_mode<synchronous>, transform_indices = @transform_5, window_bounds = array<i64: 128, 64>}, {pipeline_mode = #tpu.pipeline_mode<synchronous>, transform_indices = @transform_6, window_bounds = array<i64: 128, 64>}, {pipeline_mode = #tpu.pipeline_mode<synchronous>, transform_indices = @transform_7, window_bounds = array<i64: 1, 64>}, {pipeline_mode = #tpu.pipeline_mode<synchronous>, transform_indices = @transform_8, window_bounds = array<i64: 64, 128>}, {pipeline_mode = #tpu.pipeline_mode<synchronous>, transform_indices = @transform_9, window_bounds = array<i64: 1, 128>}, {transform_indices = @transform_10, window_bounds = array<i64: 8, 128>}]} {
    %c0 = arith.constant 0 : index
    %c0_0 = arith.constant 0 : index
    %0 = vector.load %arg1[%c0, %c0_0] : memref<8x64xf32, #tpu.memory_space<vmem>>, vector<8x64xf32>
    %c0_1 = arith.constant 0 : index
    %c0_2 = arith.constant 0 : index
    %1 = vector.load %arg2[%c0_1, %c0_2] : memref<64x1408xf32, #tpu.memory_space<vmem>>, vector<64x1408xf32>
    %cst = arith.constant dense<0.000000e+00> : vector<8x1408xf32>
    %2 = tpu.matmul %0, %1, %cst {dimension_numbers = #tpu.dot_dimension_numbers<[1], [0], [0], [1], [0, 0, 1, 1], [], []>} : vector<8x64xf32>, vector<64x1408xf32>, vector<8x1408xf32> -> vector<8x1408xf32>
    %c0_3 = arith.constant 0 : index
    %c0_4 = arith.constant 0 : index
    %3 = vector.load %arg3[%c0_3, %c0_4] : memref<1x1408xf32, #tpu.memory_space<vmem>>, vector<1x1408xf32>
    %4 = vector.broadcast %3 : vector<1x1408xf32> to vector<8x1408xf32>
    %5 = arith.addf %2, %4 : vector<8x1408xf32>
    %cst_5 = arith.constant 0.000000e+00 : f32
    %6 = vector.broadcast %cst_5 : f32 to vector<8x1408xf32>
    %7 = arith.maximumf %5, %6 : vector<8x1408xf32>
    %8 = vector.extract_strided_slice %7 {offsets = [0, 0], sizes = [8, 128], strides = [1, 1]} : vector<8x1408xf32> to vector<8x128xf32>
    %9 = vector.extract_strided_slice %7 {offsets = [0, 128], sizes = [8, 1280], strides = [1, 1]} : vector<8x1408xf32> to vector<8x1280xf32>
    %c0_6 = arith.constant 0 : index
    %c0_7 = arith.constant 0 : index
    %10 = vector.load %arg4[%c0_6, %c0_7] : memref<1280x128xf32, #tpu.memory_space<vmem>>, vector<1280x128xf32>
    %cst_8 = arith.constant dense<0.000000e+00> : vector<8x128xf32>
    %11 = tpu.matmul %9, %10, %cst_8 {dimension_numbers = #tpu.dot_dimension_numbers<[1], [0], [0], [1], [0, 0, 1, 1], [], []>} : vector<8x1280xf32>, vector<1280x128xf32>, vector<8x128xf32> -> vector<8x128xf32>
    %c0_9 = arith.constant 0 : index
    %c0_10 = arith.constant 0 : index
    %12 = vector.load %arg5[%c0_9, %c0_10] : memref<1x128xf32, #tpu.memory_space<vmem>>, vector<1x128xf32>
    %13 = vector.broadcast %12 : vector<1x128xf32> to vector<8x128xf32>
    %14 = arith.addf %11, %13 : vector<8x128xf32>
    %cst_11 = arith.constant 0.000000e+00 : f32
    %15 = vector.broadcast %cst_11 : f32 to vector<8x128xf32>
    %16 = arith.maximumf %14, %15 : vector<8x128xf32>
    %c0_12 = arith.constant 0 : index
    %c0_13 = arith.constant 0 : index
    %17 = vector.load %arg6[%c0_12, %c0_13] : memref<128x64xf32, #tpu.memory_space<vmem>>, vector<128x64xf32>
    %cst_14 = arith.constant dense<0.000000e+00> : vector<8x64xf32>
    %18 = tpu.matmul %8, %17, %cst_14 {dimension_numbers = #tpu.dot_dimension_numbers<[1], [0], [0], [1], [0, 0, 1, 1], [], []>} : vector<8x128xf32>, vector<128x64xf32>, vector<8x64xf32> -> vector<8x64xf32>
    %c0_15 = arith.constant 0 : index
    %c0_16 = arith.constant 0 : index
    %19 = vector.load %arg7[%c0_15, %c0_16] : memref<128x64xf32, #tpu.memory_space<vmem>>, vector<128x64xf32>
    %cst_17 = arith.constant dense<0.000000e+00> : vector<8x64xf32>
    %20 = tpu.matmul %16, %19, %cst_17 {dimension_numbers = #tpu.dot_dimension_numbers<[1], [0], [0], [1], [0, 0, 1, 1], [], []>} : vector<8x128xf32>, vector<128x64xf32>, vector<8x64xf32> -> vector<8x64xf32>
    %21 = arith.addf %18, %20 : vector<8x64xf32>
    %c0_18 = arith.constant 0 : index
    %c0_19 = arith.constant 0 : index
    %22 = vector.load %arg8[%c0_18, %c0_19] : memref<1x64xf32, #tpu.memory_space<vmem>>, vector<1x64xf32>
    %23 = vector.broadcast %22 : vector<1x64xf32> to vector<8x64xf32>
    %24 = arith.addf %21, %23 : vector<8x64xf32>
    %cst_20 = arith.constant 0.000000e+00 : f32
    %25 = vector.broadcast %cst_20 : f32 to vector<8x64xf32>
    %26 = arith.maximumf %24, %25 : vector<8x64xf32>
    %c0_21 = arith.constant 0 : index
    %c0_22 = arith.constant 0 : index
    %27 = vector.load %arg9[%c0_21, %c0_22] : memref<64x128xf32, #tpu.memory_space<vmem>>, vector<64x128xf32>
    %cst_23 = arith.constant dense<0.000000e+00> : vector<8x128xf32>
    %28 = tpu.matmul %26, %27, %cst_23 {dimension_numbers = #tpu.dot_dimension_numbers<[1], [0], [0], [1], [0, 0, 1, 1], [], []>} : vector<8x64xf32>, vector<64x128xf32>, vector<8x128xf32> -> vector<8x128xf32>
    %c0_24 = arith.constant 0 : index
    %c0_25 = arith.constant 0 : index
    %29 = vector.load %arg10[%c0_24, %c0_25] : memref<1x128xf32, #tpu.memory_space<vmem>>, vector<1x128xf32>
    %30 = vector.broadcast %29 : vector<1x128xf32> to vector<8x128xf32>
    %31 = arith.addf %28, %30 : vector<8x128xf32>
    %c0_26 = arith.constant 0 : index
    %c0_27 = arith.constant 0 : index
    %32 = vector.load %arg11[%c0_26, %c0_27] : memref<8x128xf32, #tpu.memory_space<vmem>>, vector<8x128xf32>
    tpu.vector_store %arg11[%c0_26, %c0_27], %31 {strides = array<i32>} : memref<8x128xf32, #tpu.memory_space<vmem>>, vector<8x128xf32>,
    return
  }
  func.func @transform_0(%arg0: i32) -> (i32, i32) {
    %c0_i32 = arith.constant 0 : i32
    %c0_i32_0 = arith.constant 0 : i32
    return %arg0, %c0_i32 : i32, i32
  }
  func.func @transform_1(%arg0: i32) -> (i32, i32) {
    %c0_i32 = arith.constant 0 : i32
    %c0_i32_0 = arith.constant 0 : i32
    %c0_i32_1 = arith.constant 0 : i32
    return %c0_i32, %c0_i32_0 : i32, i32
  }
  func.func @transform_2(%arg0: i32) -> (i32, i32) {
    %c0_i32 = arith.constant 0 : i32
    %c0_i32_0 = arith.constant 0 : i32
    %c0_i32_1 = arith.constant 0 : i32
    return %c0_i32, %c0_i32_0 : i32, i32
  }
  func.func @transform_3(%arg0: i32) -> (i32, i32) {
    %c0_i32 = arith.constant 0 : i32
    %c0_i32_0 = arith.constant 0 : i32
    %c0_i32_1 = arith.constant 0 : i32
    return %c0_i32, %c0_i32_0 : i32, i32
  }
  func.func @transform_4(%arg0: i32) -> (i32, i32) {
    %c0_i32 = arith.constant 0 : i32
    %c0_i32_0 = arith.constant 0 : i32
    %c0_i32_1 = arith.constant 0 : i32
    return %c0_i32, %c0_i32_0 : i32, i32
  }
  func.func @transform_5(%arg0: i32) -> (i32, i32) {
    %c0_i32 = arith.constant 0 : i32
    %c0_i32_0 = arith.constant 0 : i32
    %c0_i32_1 = arith.constant 0 : i32
    return %c0_i32, %c0_i32_0 : i32, i32
  }
  func.func @transform_6(%arg0: i32) -> (i32, i32) {
    %c0_i32 = arith.constant 0 : i32
    %c0_i32_0 = arith.constant 0 : i32
    %c0_i32_1 = arith.constant 0 : i32
    return %c0_i32, %c0_i32_0 : i32, i32
  }
  func.func @transform_7(%arg0: i32) -> (i32, i32) {
    %c0_i32 = arith.constant 0 : i32
    %c0_i32_0 = arith.constant 0 : i32
    %c0_i32_1 = arith.constant 0 : i32
    return %c0_i32, %c0_i32_0 : i32, i32
  }
  func.func @transform_8(%arg0: i32) -> (i32, i32) {
    %c0_i32 = arith.constant 0 : i32
    %c0_i32_0 = arith.constant 0 : i32
    %c0_i32_1 = arith.constant 0 : i32
    return %c0_i32, %c0_i32_0 : i32, i32
  }
  func.func @transform_9(%arg0: i32) -> (i32, i32) {
    %c0_i32 = arith.constant 0 : i32
    %c0_i32_0 = arith.constant 0 : i32
    %c0_i32_1 = arith.constant 0 : i32
    return %c0_i32, %c0_i32_0 : i32, i32
  }
  func.func @transform_10(%arg0: i32) -> (i32, i32) {
    %c0_i32 = arith.constant 0 : i32
    %c0_i32_0 = arith.constant 0 : i32
    return %arg0, %c0_i32 : i32, i32
  }
}

</mosaic_0001>

<llo_original>
// kernel: tpu_custom_call.1
$region0: #{tpu_custom_call.1}
  #allocation0 [shape = 'u32[]', space=smem, size = 0x4, offset = 0x4, fixed_abs, tag = 'smem constant byte address 0x4 - core index']
  #allocation1 [shape = 'u32[144,128]{1,0:T(1,128)}', space=vmem, size = 0x12000, scoped, tag = 'internal scratch']
  %s0 = inlined_call_operand.vmem [shape: f32[8,64], index: 0, kind: input, shape index: {}]
  %s1 = inlined_call_operand.hbm [shape: f32[64,1408], index: 1, kind: input, shape index: {}]
  %s2 = inlined_call_operand.vmem [shape: f32[1,1408], index: 2, kind: input, shape index: {}]
  %s3 = inlined_call_operand.hbm [shape: f32[1280,128], index: 3, kind: input, shape index: {}]
  %s4 = inlined_call_operand.vmem [shape: f32[1,128], index: 4, kind: input, shape index: {}]
  %s5 = inlined_call_operand.vmem [shape: f32[128,64], index: 5, kind: input, shape index: {}]
  %s6 = inlined_call_operand.vmem [shape: f32[128,64], index: 6, kind: input, shape index: {}]
  %s7 = inlined_call_operand.vmem [shape: f32[1,64], index: 7, kind: input, shape index: {}]
  %s8 = inlined_call_operand.vmem [shape: f32[64,128], index: 8, kind: input, shape index: {}]
  %s9 = inlined_call_operand.vmem [shape: f32[1,128], index: 9, kind: input, shape index: {}]
  %s10 = inlined_call_operand.hbm [shape: f32[8,128], index: 10, kind: output, shape index: {}]
  %s11 = sld [smem:[#allocation0]]
  $region58: #{tpu_custom_call.1} parent=0
    _
  %s13 = ssub.s32 1, %s11
  %s14 = scalar_select 0, %s13, %s11
  $region1: #{tpu_custom_call.1} parent=0
    #allocation2 [shape = 'u8[360448]{0}', space=vmem, size = 0x58000, scoped, tag = 'input window, operand 1, single buffered']
    #allocation3 [shape = 's32[1]{0}', space=sflag, size = 0x4, scoped, tag = 'scoped memory for tpu_custom_call.1']
    #allocation4 [shape = 's32[1]{0}', space=sflag, size = 0x4, scoped, tag = 'scoped memory for tpu_custom_call.1']
    #allocation5 [shape = 'u8[655360]{0}', space=vmem, size = 0xa0000, scoped, tag = 'input window, operand 3, single buffered']
    #allocation6 [shape = 's32[1]{0}', space=sflag, size = 0x4, scoped, tag = 'scoped memory for tpu_custom_call.1']
    #allocation7 [shape = 'u8[4096]{0}', space=vmem, size = 0x1000, scoped, tag = 'output window, operand 0, single buffered']
    %15 = vsyncpa [#allocation3], 0
    %16 = vsyncpa [#allocation6], 0
    %17 = vsyncpa [#allocation4], 0
    // Predicated region
    $region2: #{tpu_custom_call.1} parent=1 // pred_check
      _
    $region3: #{tpu_custom_call.1} parent=1 // pred_check_branch
      %19 = sbr.rel (0) target = $region5
    $region4: #{tpu_custom_call.1} parent=1 // pred_region
      _
    $region5: #{tpu_custom_call.1} parent=1 // pred_fallthru
      _
    // Predicated region
    $region6: #{tpu_custom_call.1} parent=1 // pred_check
      _
    $region7: #{tpu_custom_call.1} parent=1 // pred_check_branch
      %21 = sbr.rel (0) target = $region9
    $region8: #{tpu_custom_call.1} parent=1 // pred_region
      %s23 = ssub.s32 11264, 11264
      %24 = vsyncadd [#allocation3], %s23
      %s25 = sshll.u32 [#allocation2], 4
      %s26 = int_to_ptr.vmem [resolvable:$true] %s25
      %31 = dma.hbm_to_vmem [thread:$0]  %s1, 11264, %s26, [#allocation3], 1408, 1408, 88
    $region9: #{tpu_custom_call.1} parent=1 // pred_fallthru
      _
    // Predicated region
    $region10: #{tpu_custom_call.1} parent=1 // pred_check
      _
    $region11: #{tpu_custom_call.1} parent=1 // pred_check_branch
      %33 = sbr.rel (0) target = $region13
    $region12: #{tpu_custom_call.1} parent=1 // pred_region
      _
    $region13: #{tpu_custom_call.1} parent=1 // pred_fallthru
      _
    // Predicated region
    $region14: #{tpu_custom_call.1} parent=1 // pred_check
      _
    $region15: #{tpu_custom_call.1} parent=1 // pred_check_branch
      %35 = sbr.rel (0) target = $region17
    $region16: #{tpu_custom_call.1} parent=1 // pred_region
      %s37 = ssub.s32 20480, 20480
      %38 = vsyncadd [#allocation6], %s37
      %s39 = sshll.u32 [#allocation5], 4
      %s40 = int_to_ptr.vmem [resolvable:$true] %s39
      %45 = dma.hbm_to_vmem [thread:$0]  %s3, 20480, %s40, [#allocation6], 128, 128, 8
    $region17: #{tpu_custom_call.1} parent=1 // pred_fallthru
      _
    // Predicated region
    $region18: #{tpu_custom_call.1} parent=1 // pred_check
      _
    $region19: #{tpu_custom_call.1} parent=1 // pred_check_branch
      %47 = sbr.rel (0) target = $region21
    $region20: #{tpu_custom_call.1} parent=1 // pred_region
      _
    $region21: #{tpu_custom_call.1} parent=1 // pred_fallthru
      _
    // Predicated region
    $region22: #{tpu_custom_call.1} parent=1 // pred_check
      _
    $region23: #{tpu_custom_call.1} parent=1 // pred_check_branch
      %49 = sbr.rel (0) target = $region25
    $region24: #{tpu_custom_call.1} parent=1 // pred_region
      _
    $region25: #{tpu_custom_call.1} parent=1 // pred_fallthru
      _
    // Predicated region
    $region26: #{tpu_custom_call.1} parent=1 // pred_check
      _
    $region27: #{tpu_custom_call.1} parent=1 // pred_check_branch
      %51 = sbr.rel (0) target = $region29
    $region28: #{tpu_custom_call.1} parent=1 // pred_region
      _
    $region29: #{tpu_custom_call.1} parent=1 // pred_fallthru
      _
    // Predicated region
    $region30: #{tpu_custom_call.1} parent=1 // pred_check
      _
    $region31: #{tpu_custom_call.1} parent=1 // pred_check_branch
      %53 = sbr.rel (0) target = $region33
    $region32: #{tpu_custom_call.1} parent=1 // pred_region
      _
    $region33: #{tpu_custom_call.1} parent=1 // pred_fallthru
      _
    // Predicated region
    $region34: #{tpu_custom_call.1} parent=1 // pred_check
      _
    $region35: #{tpu_custom_call.1} parent=1 // pred_check_branch
      %55 = sbr.rel (0) target = $region37
    $region36: #{tpu_custom_call.1} parent=1 // pred_region
      _
    $region37: #{tpu_custom_call.1} parent=1 // pred_fallthru
      _
    // Predicated region
    $region38: #{tpu_custom_call.1} parent=1 // pred_check
      _
    $region39: #{tpu_custom_call.1} parent=1 // pred_check_branch
      %57 = sbr.rel (0) target = $region41
    $region40: #{tpu_custom_call.1} parent=1 // pred_region
      _
    $region41: #{tpu_custom_call.1} parent=1 // pred_fallthru
      _
    // Predicated region
    $region42: #{tpu_custom_call.1} parent=1 // pred_check
      _
    $region43: #{tpu_custom_call.1} parent=1 // pred_check_branch
      %59 = sbr.rel (0) target = $region45
    $region44: #{tpu_custom_call.1} parent=1 // pred_region
      %60 = dma.done [#allocation3], 11264
    $region45: #{tpu_custom_call.1} parent=1 // pred_fallthru
      _
    // Predicated region
    $region46: #{tpu_custom_call.1} parent=1 // pred_check
      _
    $region47: #{tpu_custom_call.1} parent=1 // pred_check_branch
      %62 = sbr.rel (0) target = $region49
    $region48: #{tpu_custom_call.1} parent=1 // pred_region
      %63 = dma.done [#allocation6], 20480
    $region49: #{tpu_custom_call.1} parent=1 // pred_fallthru
      _
    %v64 = vld [vmem:[%s0] sm:$0xff]
    %v65 = vld [vmem:[#allocation2] sm:$0xff]
    %v66 = vld [vmem:[#allocation2 + $0x8] sm:$0xff]
    %v67 = vld [vmem:[#allocation2 + $0x10] sm:$0xff]
    %v68 = vld [vmem:[#allocation2 + $0x18] sm:$0xff]
    %v69 = vld [vmem:[#allocation2 + $0x20] sm:$0xff]
    %v70 = vld [vmem:[#allocation2 + $0x28] sm:$0xff]
    %v71 = vld [vmem:[#allocation2 + $0x30] sm:$0xff]
    %v72 = vld [vmem:[#allocation2 + $0x38] sm:$0xff]
    %v73 = vld [vmem:[#allocation2 + $0x40] sm:$0xff]
    %v74 = vld [vmem:[#allocation2 + $0x48] sm:$0xff]
    %v75 = vld [vmem:[#allocation2 + $0x50] sm:$0xff]
    %v76 = vld [vmem:[#allocation2 + $0x58] sm:$0xff]
    %v77 = vld [vmem:[#allocation2 + $0x60] sm:$0xff]
    %v78 = vld [vmem:[#allocation2 + $0x68] sm:$0xff]
    %v79 = vld [vmem:[#allocation2 + $0x70] sm:$0xff]
    %v80 = vld [vmem:[#allocation2 + $0x78] sm:$0xff]
    %v81 = vld [vmem:[#allocation2 + $0x80] sm:$0xff]
    %v82 = vld [vmem:[#allocation2 + $0x88] sm:$0xff]
    %v83 = vld [vmem:[#allocation2 + $0x90] sm:$0xff]
    %v84 = vld [vmem:[#allocation2 + $0x98] sm:$0xff]
    %v85 = vld [vmem:[#allocation2 + $0xa0] sm:$0xff]
    %v86 = vld [vmem:[#allocation2 + $0xa8] sm:$0xff]
    %v87 = vld [vmem:[#allocation2 + $0xb0] sm:$0xff]
    %v88 = vld [vmem:[#allocation2 + $0xb8] sm:$0xff]
    %v89 = vld [vmem:[#allocation2 + $0xc0] sm:$0xff]
    %v90 = vld [vmem:[#allocation2 + $0xc8] sm:$0xff]
    %v91 = vld [vmem:[#allocation2 + $0xd0] sm:$0xff]
    %v92 = vld [vmem:[#allocation2 + $0xd8] sm:$0xff]
    %v93 = vld [vmem:[#allocation2 + $0xe0] sm:$0xff]
    %v94 = vld [vmem:[#allocation2 + $0xe8] sm:$0xff]
    %v95 = vld [vmem:[#allocation2 + $0xf0] sm:$0xff]
    %v96 = vld [vmem:[#allocation2 + $0xf8] sm:$0xff]
    %v97 = vld [vmem:[#allocation2 + $0x100] sm:$0xff]
    %v98 = vld [vmem:[#allocation2 + $0x108] sm:$0xff]
    %v99 = vld [vmem:[#allocation2 + $0x110] sm:$0xff]
    %v100 = vld [vmem:[#allocation2 + $0x118] sm:$0xff]
    %v101 = vld [vmem:[#allocation2 + $0x120] sm:$0xff]
    %v102 = vld [vmem:[#allocation2 + $0x128] sm:$0xff]
    %v103 = vld [vmem:[#allocation2 + $0x130] sm:$0xff]
    %v104 = vld [vmem:[#allocation2 + $0x138] sm:$0xff]
    %v105 = vld [vmem:[#allocation2 + $0x140] sm:$0xff]
    %v106 = vld [vmem:[#allocation2 + $0x148] sm:$0xff]
    %v107 = vld [vmem:[#allocation2 + $0x150] sm:$0xff]
    %v108 = vld [vmem:[#allocation2 + $0x158] sm:$0xff]
    %v109 = vld [vmem:[#allocation2 + $0x160] sm:$0xff]
    %v110 = vld [vmem:[#allocation2 + $0x168] sm:$0xff]
    %v111 = vld [vmem:[#allocation2 + $0x170] sm:$0xff]
    %v112 = vld [vmem:[#allocation2 + $0x178] sm:$0xff]
    %v113 = vld [vmem:[#allocation2 + $0x180] sm:$0xff]
    %v114 = vld [vmem:[#allocation2 + $0x188] sm:$0xff]
    %v115 = vld [vmem:[#allocation2 + $0x190] sm:$0xff]
    %v116 = vld [vmem:[#allocation2 + $0x198] sm:$0xff]
    %v117 = vld [vmem:[#allocation2 + $0x1a0] sm:$0xff]
    %v118 = vld [vmem:[#allocation2 + $0x1a8] sm:$0xff]
    %v119 = vld [vmem:[#allocation2 + $0x1b0] sm:$0xff]
    %v120 = vld [vmem:[#allocation2 + $0x1b8] sm:$0xff]
    %v121 = vld [vmem:[#allocation2 + $0x1c0] sm:$0xff]
    %v122 = vld [vmem:[#allocation2 + $0x1c8] sm:$0xff]
    %v123 = vld [vmem:[#allocation2 + $0x1d0] sm:$0xff]
    %v124 = vld [vmem:[#allocation2 + $0x1d8] sm:$0xff]
    %v125 = vld [vmem:[#allocation2 + $0x1e0] sm:$0xff]
    %v126 = vld [vmem:[#allocation2 + $0x1e8] sm:$0xff]
    %v127 = vld [vmem:[#allocation2 + $0x1f0] sm:$0xff]
    %v128 = vld [vmem:[#allocation2 + $0x1f8] sm:$0xff]
    %v129 = vld [vmem:[#allocation2 + $0x200] sm:$0xff]
    %v130 = vld [vmem:[#allocation2 + $0x208] sm:$0xff]
    %v131 = vld [vmem:[#allocation2 + $0x210] sm:$0xff]
    %v132 = vld [vmem:[#allocation2 + $0x218] sm:$0xff]
    %v133 = vld [vmem:[#allocation2 + $0x220] sm:$0xff]
    %v134 = vld [vmem:[#allocation2 + $0x228] sm:$0xff]
    %v135 = vld [vmem:[#allocation2 + $0x230] sm:$0xff]
    %v136 = vld [vmem:[#allocation2 + $0x238] sm:$0xff]
    %v137 = vld [vmem:[#allocation2 + $0x240] sm:$0xff]
    %v138 = vld [vmem:[#allocation2 + $0x248] sm:$0xff]
    %v139 = vld [vmem:[#allocation2 + $0x250] sm:$0xff]
    %v140 = vld [vmem:[#allocation2 + $0x258] sm:$0xff]
    %v141 = vld [vmem:[#allocation2 + $0x260] sm:$0xff]
    %v142 = vld [vmem:[#allocation2 + $0x268] sm:$0xff]
    %v143 = vld [vmem:[#allocation2 + $0x270] sm:$0xff]
    %v144 = vld [vmem:[#allocation2 + $0x278] sm:$0xff]
    %v145 = vld [vmem:[#allocation2 + $0x280] sm:$0xff]
    %v146 = vld [vmem:[#allocation2 + $0x288] sm:$0xff]
    %v147 = vld [vmem:[#allocation2 + $0x290] sm:$0xff]
    %v148 = vld [vmem:[#allocation2 + $0x298] sm:$0xff]
    %v149 = vld [vmem:[#allocation2 + $0x2a0] sm:$0xff]
    %v150 = vld [vmem:[#allocation2 + $0x2a8] sm:$0xff]
    %v151 = vld [vmem:[#allocation2 + $0x2b0] sm:$0xff]
    %v152 = vld [vmem:[#allocation2 + $0x2b8] sm:$0xff]
    %v153 = vld [vmem:[%s2] sm:$0xff]
    %v154 = vld [vmem:[%s2 + $0x8] sm:$0x7]
    %v157 = vlaneseq
    %v158 = vshrl.u32 %v157, 7
    %v159 = vsub.s32 0, %v158
    %v160 = vrot.slane %v153, %v159
    %v161 = vlaneseq
    %v162 = vshrl.u32 %v161, 7
    %v163 = vsub.s32 1, %v162
    %v164 = vrot.slane %v153, %v163
    %v165 = vlaneseq
    %v166 = vshrl.u32 %v165, 7
    %v167 = vsub.s32 2, %v166
    %v168 = vrot.slane %v153, %v167
    %v169 = vlaneseq
    %v170 = vshrl.u32 %v169, 7
    %v171 = vsub.s32 3, %v170
    %v172 = vrot.slane %v153, %v171
    %v173 = vlaneseq
    %v174 = vshrl.u32 %v173, 7
    %v175 = vsub.s32 4, %v174
    %v176 = vrot.slane %v153, %v175
    %v177 = vlaneseq
    %v178 = vshrl.u32 %v177, 7
    %v179 = vsub.s32 5, %v178
    %v180 = vrot.slane %v153, %v179
    %v181 = vlaneseq
    %v182 = vshrl.u32 %v181, 7
    %v183 = vsub.s32 6, %v182
    %v184 = vrot.slane %v153, %v183
    %v185 = vlaneseq
    %v186 = vshrl.u32 %v185, 7
    %v187 = vsub.s32 7, %v186
    %v188 = vrot.slane %v153, %v187
    %v189 = vlaneseq
    %v190 = vshrl.u32 %v189, 7
    %v191 = vsub.s32 0, %v190
    %v192 = vrot.slane %v154, %v191
    %v193 = vlaneseq
    %v194 = vshrl.u32 %v193, 7
    %v195 = vsub.s32 1, %v194
    %v196 = vrot.slane %v154, %v195
    %v197 = vlaneseq
    %v198 = vshrl.u32 %v197, 7
    %v199 = vsub.s32 2, %v198
    %v200 = vrot.slane %v154, %v199
    %vm212 = vcmask 523264
    %v214 = vsel %vm212, %v64, 0
    %216 = vmatprep.subr.mxu0 0.0
    %217 = vmatpush1.msra.mxu0 0.0
    %218 = vmatprep.subr.mxu0 0.0
    %219 = vmatpush1.msra.mxu0 0.0
    %220 = vmatprep.subr.mxu0 0.0
    %221 = vmatpush1.msra.mxu0 0.0
    %222 = vmatprep.subr.mxu0 0.0
    %223 = vmatpush1.msra.mxu0 0.0
    %224 = vmatprep.subr.mxu0 0.0
    %225 = vmatpush1.msra.mxu0 0.0
    %226 = vmatprep.subr.mxu0 0.0
    %227 = vmatpush1.msra.mxu0 0.0
    %228 = vmatprep.subr.mxu0 0.0
    %229 = vmatpush1.msra.mxu0 0.0
    %230 = vmatprep.subr.mxu0 0.0
    %231 = vmatpush1.msra.mxu0 0.0
    %232 = vmatprep.subr.mxu0 %v143
    %233 = vmatpush1.msra.mxu0 %v142
    %234 = vmatprep.subr.mxu0 %v132
    %235 = vmatpush1.msra.mxu0 %v131
    %236 = vmatprep.subr.mxu0 %v121
    %237 = vmatpush1.msra.mxu0 %v120
    %238 = vmatprep.subr.mxu0 %v110
    %239 = vmatpush1.msra.mxu0 %v109
    %240 = vmatprep.subr.mxu0 %v99
    %241 = vmatpush1.msra.mxu0 %v98
    %242 = vmatprep.subr.mxu0 %v88
    %243 = vmatpush1.msra.mxu0 %v87
    %244 = vmatprep.subr.mxu0 %v77
    %245 = vmatpush1.msra.mxu0 %v76
    %246 = vmatprep.subr.mxu0 %v66
    %247 = vmatpush1.msra.mxu0 %v65
    %248 = vmatprep.subr.mxu0 0.0
    %249 = vmatpush2.msra.mxu0 0.0
    %250 = vmatprep.subr.mxu0 0.0
    %251 = vmatpush2.msra.mxu0 0.0
    %252 = vmatprep.subr.mxu0 0.0
    %253 = vmatpush2.msra.mxu0 0.0
    %254 = vmatprep.subr.mxu0 0.0
    %255 = vmatpush2.msra.mxu0 0.0
    %256 = vmatprep.subr.mxu0 0.0
    %257 = vmatpush2.msra.mxu0 0.0
    %258 = vmatprep.subr.mxu0 0.0
    %259 = vmatpush2.msra.mxu0 0.0
    %260 = vmatprep.subr.mxu0 0.0
    %261 = vmatpush2.msra.mxu0 0.0
    %262 = vmatprep.subr.mxu0 0.0
    %263 = vmatpush2.msra.mxu0 0.0
    %264 = vmatprep.subr.mxu0 0.0
    %265 = vmatpush2.msra.mxu0 0.0
    %266 = vmatprep.subr.mxu0 0.0
    %267 = vmatpush2.msra.mxu0 0.0
    %268 = vmatprep.subr.mxu0 0.0
    %269 = vmatpush2.msra.mxu0 0.0
    %270 = vmatprep.subr.mxu0 0.0
    %271 = vmatpush2.msra.mxu0 0.0
    %272 = vmatprep.subr.mxu0 0.0
    %273 = vmatpush2.msra.mxu0 0.0
    %274 = vmatprep.subr.mxu0 0.0
    %275 = vmatpush2.msra.mxu0 0.0
    %276 = vmatprep.subr.mxu0 0.0
    %277 = vmatpush2.msra.mxu0 0.0
    %278 = vmatprep.subr.mxu0 0.0
    %279 = vmatpush2.msra.mxu0 0.0
    %280 = vmatprep.mubr.f32.mxu0 0.0
    %281 = vmatmul.mubr.f32.gmra.mxu0 %v214
    %v282 = vpop.f32.mrf.mxu0
    %v283 = vadd.f32 %v160, %v282
    %v284 = vpop.f32.mrf.mxu0
    %v285 = vadd.f32 %v164, %v284
    %286 = vdwg.mxu0
    %287 = vmatprep.subr.mxu0 0.0
    %288 = vmatpush1.msra.mxu0 0.0
    %289 = vmatprep.subr.mxu0 0.0
    %290 = vmatpush1.msra.mxu0 0.0
    %291 = vmatprep.subr.mxu0 0.0
    %292 = vmatpush1.msra.mxu0 0.0
    %293 = vmatprep.subr.mxu0 0.0
    %294 = vmatpush1.msra.mxu0 0.0
    %295 = vmatprep.subr.mxu0 0.0
    %296 = vmatpush1.msra.mxu0 0.0
    %297 = vmatprep.subr.mxu0 0.0
    %298 = vmatpush1.msra.mxu0 0.0
    %299 = vmatprep.subr.mxu0 0.0
    %300 = vmatpush1.msra.mxu0 0.0
    %301 = vmatprep.subr.mxu0 0.0
    %302 = vmatpush1.msra.mxu0 0.0
    %303 = vmatprep.subr.mxu0 %v145
    %304 = vmatpush1.msra.mxu0 %v144
    %305 = vmatprep.subr.mxu0 %v134
    %306 = vmatpush1.msra.mxu0 %v133
    %307 = vmatprep.subr.mxu0 %v123
    %308 = vmatpush1.msra.mxu0 %v122
    %309 = vmatprep.subr.mxu0 %v112
    %310 = vmatpush1.msra.mxu0 %v111
    %311 = vmatprep.subr.mxu0 %v101
    %312 = vmatpush1.msra.mxu0 %v100
    %313 = vmatprep.subr.mxu0 %v90
    %314 = vmatpush1.msra.mxu0 %v89
    %315 = vmatprep.subr.mxu0 %v79
    %316 = vmatpush1.msra.mxu0 %v78
    %317 = vmatprep.subr.mxu0 %v68
    %318 = vmatpush1.msra.mxu0 %v67
    %319 = vmatprep.subr.mxu0 0.0
    %320 = vmatpush2.msra.mxu0 0.0
    %321 = vmatprep.subr.mxu0 0.0
    %322 = vmatpush2.msra.mxu0 0.0
    %323 = vmatprep.subr.mxu0 0.0
    %324 = vmatpush2.msra.mxu0 0.0
    %325 = vmatprep.subr.mxu0 0.0
    %326 = vmatpush2.msra.mxu0 0.0
    %327 = vmatprep.subr.mxu0 0.0
    %328 = vmatpush2.msra.mxu0 0.0
    %329 = vmatprep.subr.mxu0 0.0
    %330 = vmatpush2.msra.mxu0 0.0
    %331 = vmatprep.subr.mxu0 0.0
    %332 = vmatpush2.msra.mxu0 0.0
    %333 = vmatprep.subr.mxu0 0.0
    %334 = vmatpush2.msra.mxu0 0.0
    %335 = vmatprep.subr.mxu0 0.0
    %336 = vmatpush2.msra.mxu0 0.0
    %337 = vmatprep.subr.mxu0 0.0
    %338 = vmatpush2.msra.mxu0 0.0
    %339 = vmatprep.subr.mxu0 0.0
    %340 = vmatpush2.msra.mxu0 0.0
    %341 = vmatprep.subr.mxu0 0.0
    %342 = vmatpush2.msra.mxu0 0.0
    %343 = vmatprep.subr.mxu0 0.0
    %344 = vmatpush2.msra.mxu0 0.0
    %345 = vmatprep.subr.mxu0 0.0
    %346 = vmatpush2.msra.mxu0 0.0
    %347 = vmatprep.subr.mxu0 0.0
    %348 = vmatpush2.msra.mxu0 0.0
    %349 = vmatprep.subr.mxu0 0.0
    %350 = vmatpush2.msra.mxu0 0.0
    %351 = vmatprep.mubr.f32.mxu0 0.0
    %352 = vmatmul.mubr.f32.gmra.mxu0 %v214
    %v353 = vpop.f32.mrf.mxu0
    %v354 = vadd.f32 %v168, %v353
    %v355 = vpop.f32.mrf.mxu0
    %v356 = vadd.f32 %v172, %v355
    %357 = vdwg.mxu0
    %358 = vmatprep.subr.mxu0 0.0
    %359 = vmatpush1.msra.mxu0 0.0
    %360 = vmatprep.subr.mxu0 0.0
    %361 = vmatpush1.msra.mxu0 0.0
    %362 = vmatprep.subr.mxu0 0.0
    %363 = vmatpush1.msra.mxu0 0.0
    %364 = vmatprep.subr.mxu0 0.0
    %365 = vmatpush1.msra.mxu0 0.0
    %366 = vmatprep.subr.mxu0 0.0
    %367 = vmatpush1.msra.mxu0 0.0
    %368 = vmatprep.subr.mxu0 0.0
    %369 = vmatpush1.msra.mxu0 0.0
    %370 = vmatprep.subr.mxu0 0.0
    %371 = vmatpush1.msra.mxu0 0.0
    %372 = vmatprep.subr.mxu0 0.0
    %373 = vmatpush1.msra.mxu0 0.0
    %374 = vmatprep.subr.mxu0 %v147
    %375 = vmatpush1.msra.mxu0 %v146
    %376 = vmatprep.subr.mxu0 %v136
    %377 = vmatpush1.msra.mxu0 %v135
    %378 = vmatprep.subr.mxu0 %v125
    %379 = vmatpush1.msra.mxu0 %v124
    %380 = vmatprep.subr.mxu0 %v114
    %381 = vmatpush1.msra.mxu0 %v113
    %382 = vmatprep.subr.mxu0 %v103
    %383 = vmatpush1.msra.mxu0 %v102
    %384 = vmatprep.subr.mxu0 %v92
    %385 = vmatpush1.msra.mxu0 %v91
    %386 = vmatprep.subr.mxu0 %v81
    %387 = vmatpush1.msra.mxu0 %v80
    %388 = vmatprep.subr.mxu0 %v70
    %389 = vmatpush1.msra.mxu0 %v69
    %390 = vmatprep.subr.mxu0 0.0
    %391 = vmatpush2.msra.mxu0 0.0
    %392 = vmatprep.subr.mxu0 0.0
    %393 = vmatpush2.msra.mxu0 0.0
    %394 = vmatprep.subr.mxu0 0.0
    %395 = vmatpush2.msra.mxu0 0.0
    %396 = vmatprep.subr.mxu0 0.0
    %397 = vmatpush2.msra.mxu0 0.0
    %398 = vmatprep.subr.mxu0 0.0
    %399 = vmatpush2.msra.mxu0 0.0
    %400 = vmatprep.subr.mxu0 0.0
    %401 = vmatpush2.msra.mxu0 0.0
    %402 = vmatprep.subr.mxu0 0.0
    %403 = vmatpush2.msra.mxu0 0.0
    %404 = vmatprep.subr.mxu0 0.0
    %405 = vmatpush2.msra.mxu0 0.0
    %406 = vmatprep.subr.mxu0 0.0
    %407 = vmatpush2.msra.mxu0 0.0
    %408 = vmatprep.subr.mxu0 0.0
    %409 = vmatpush2.msra.mxu0 0.0
    %410 = vmatprep.subr.mxu0 0.0
    %411 = vmatpush2.msra.mxu0 0.0
    %412 = vmatprep.subr.mxu0 0.0
    %413 = vmatpush2.msra.mxu0 0.0
    %414 = vmatprep.subr.mxu0 0.0
    %415 = vmatpush2.msra.mxu0 0.0
    %416 = vmatprep.subr.mxu0 0.0
    %417 = vmatpush2.msra.mxu0 0.0
    %418 = vmatprep.subr.mxu0 0.0
    %419 = vmatpush2.msra.mxu0 0.0
    %420 = vmatprep.subr.mxu0 0.0
    %421 = vmatpush2.msra.mxu0 0.0
    %422 = vmatprep.mubr.f32.mxu0 0.0
    %423 = vmatmul.mubr.f32.gmra.mxu0 %v214
    %v424 = vpop.f32.mrf.mxu0
    %v425 = vadd.f32 %v176, %v424
    %v426 = vpop.f32.mrf.mxu0
    %v427 = vadd.f32 %v180, %v426
    %428 = vdwg.mxu0
    %429 = vmatprep.subr.mxu0 0.0
    %430 = vmatpush1.msra.mxu0 0.0
    %431 = vmatprep.subr.mxu0 0.0
    %432 = vmatpush1.msra.mxu0 0.0
    %433 = vmatprep.subr.mxu0 0.0
    %434 = vmatpush1.msra.mxu0 0.0
    %435 = vmatprep.subr.mxu0 0.0
    %436 = vmatpush1.msra.mxu0 0.0
    %437 = vmatprep.subr.mxu0 0.0
    %438 = vmatpush1.msra.mxu0 0.0
    %439 = vmatprep.subr.mxu0 0.0
    %440 = vmatpush1.msra.mxu0 0.0
    %441 = vmatprep.subr.mxu0 0.0
    %442 = vmatpush1.msra.mxu0 0.0
    %443 = vmatprep.subr.mxu0 0.0
    %444 = vmatpush1.msra.mxu0 0.0
    %445 = vmatprep.subr.mxu0 %v149
    %446 = vmatpush1.msra.mxu0 %v148
    %447 = vmatprep.subr.mxu0 %v138
    %448 = vmatpush1.msra.mxu0 %v137
    %449 = vmatprep.subr.mxu0 %v127
    %450 = vmatpush1.msra.mxu0 %v126
    %451 = vmatprep.subr.mxu0 %v116
    %452 = vmatpush1.msra.mxu0 %v115
    %453 = vmatprep.subr.mxu0 %v105
    %454 = vmatpush1.msra.mxu0 %v104
    %455 = vmatprep.subr.mxu0 %v94
    %456 = vmatpush1.msra.mxu0 %v93
    %457 = vmatprep.subr.mxu0 %v83
    %458 = vmatpush1.msra.mxu0 %v82
    %459 = vmatprep.subr.mxu0 %v72
    %460 = vmatpush1.msra.mxu0 %v71
    %461 = vmatprep.subr.mxu0 0.0
    %462 = vmatpush2.msra.mxu0 0.0
    %463 = vmatprep.subr.mxu0 0.0
    %464 = vmatpush2.msra.mxu0 0.0
    %465 = vmatprep.subr.mxu0 0.0
    %466 = vmatpush2.msra.mxu0 0.0
    %467 = vmatprep.subr.mxu0 0.0
    %468 = vmatpush2.msra.mxu0 0.0
    %469 = vmatprep.subr.mxu0 0.0
    %470 = vmatpush2.msra.mxu0 0.0
    %471 = vmatprep.subr.mxu0 0.0
    %472 = vmatpush2.msra.mxu0 0.0
    %473 = vmatprep.subr.mxu0 0.0
    %474 = vmatpush2.msra.mxu0 0.0
    %475 = vmatprep.subr.mxu0 0.0
    %476 = vmatpush2.msra.mxu0 0.0
    %477 = vmatprep.subr.mxu0 0.0
    %478 = vmatpush2.msra.mxu0 0.0
    %479 = vmatprep.subr.mxu0 0.0
    %480 = vmatpush2.msra.mxu0 0.0
    %481 = vmatprep.subr.mxu0 0.0
    %482 = vmatpush2.msra.mxu0 0.0
    %483 = vmatprep.subr.mxu0 0.0
    %484 = vmatpush2.msra.mxu0 0.0
    %485 = vmatprep.subr.mxu0 0.0
    %486 = vmatpush2.msra.mxu0 0.0
    %487 = vmatprep.subr.mxu0 0.0
    %488 = vmatpush2.msra.mxu0 0.0
    %489 = vmatprep.subr.mxu0 0.0
    %490 = vmatpush2.msra.mxu0 0.0
    %491 = vmatprep.subr.mxu0 0.0
    %492 = vmatpush2.msra.mxu0 0.0
    %493 = vmatprep.mubr.f32.mxu0 0.0
    %494 = vmatmul.mubr.f32.gmra.mxu0 %v214
    %v495 = vpop.f32.mrf.mxu0
    %v496 = vadd.f32 %v184, %v495
    %v497 = vpop.f32.mrf.mxu0
    %v498 = vadd.f32 %v188, %v497
    %499 = vdwg.mxu0
    %500 = vmatprep.subr.mxu0 0.0
    %501 = vmatpush1.msra.mxu0 0.0
    %502 = vmatprep.subr.mxu0 0.0
    %503 = vmatpush1.msra.mxu0 0.0
    %504 = vmatprep.subr.mxu0 0.0
    %505 = vmatpush1.msra.mxu0 0.0
    %506 = vmatprep.subr.mxu0 0.0
    %507 = vmatpush1.msra.mxu0 0.0
    %508 = vmatprep.subr.mxu0 0.0
    %509 = vmatpush1.msra.mxu0 0.0
    %510 = vmatprep.subr.mxu0 0.0
    %511 = vmatpush1.msra.mxu0 0.0
    %512 = vmatprep.subr.mxu0 0.0
    %513 = vmatpush1.msra.mxu0 0.0
    %514 = vmatprep.subr.mxu0 0.0
    %515 = vmatpush1.msra.mxu0 0.0
    %516 = vmatprep.subr.mxu0 %v151
    %517 = vmatpush1.msra.mxu0 %v150
    %518 = vmatprep.subr.mxu0 %v140
    %519 = vmatpush1.msra.mxu0 %v139
    %520 = vmatprep.subr.mxu0 %v129
    %521 = vmatpush1.msra.mxu0 %v128
    %522 = vmatprep.subr.mxu0 %v118
    %523 = vmatpush1.msra.mxu0 %v117
    %524 = vmatprep.subr.mxu0 %v107
    %525 = vmatpush1.msra.mxu0 %v106
    %526 = vmatprep.subr.mxu0 %v96
    %527 = vmatpush1.msra.mxu0 %v95
    %528 = vmatprep.subr.mxu0 %v85
    %529 = vmatpush1.msra.mxu0 %v84
    %530 = vmatprep.subr.mxu0 %v74
    %531 = vmatpush1.msra.mxu0 %v73
    %532 = vmatprep.subr.mxu0 0.0
    %533 = vmatpush2.msra.mxu0 0.0
    %534 = vmatprep.subr.mxu0 0.0
    %535 = vmatpush2.msra.mxu0 0.0
    %536 = vmatprep.subr.mxu0 0.0
    %537 = vmatpush2.msra.mxu0 0.0
    %538 = vmatprep.subr.mxu0 0.0
    %539 = vmatpush2.msra.mxu0 0.0
    %540 = vmatprep.subr.mxu0 0.0
    %541 = vmatpush2.msra.mxu0 0.0
    %542 = vmatprep.subr.mxu0 0.0
    %543 = vmatpush2.msra.mxu0 0.0
    %544 = vmatprep.subr.mxu0 0.0
    %545 = vmatpush2.msra.mxu0 0.0
    %546 = vmatprep.subr.mxu0 0.0
    %547 = vmatpush2.msra.mxu0 0.0
    %548 = vmatprep.subr.mxu0 0.0
    %549 = vmatpush2.msra.mxu0 0.0
    %550 = vmatprep.subr.mxu0 0.0
    %551 = vmatpush2.msra.mxu0 0.0
    %552 = vmatprep.subr.mxu0 0.0
    %553 = vmatpush2.msra.mxu0 0.0
    %554 = vmatprep.subr.mxu0 0.0
    %555 = vmatpush2.msra.mxu0 0.0
    %556 = vmatprep.subr.mxu0 0.0
    %557 = vmatpush2.msra.mxu0 0.0
    %558 = vmatprep.subr.mxu0 0.0
    %559 = vmatpush2.msra.mxu0 0.0
    %560 = vmatprep.subr.mxu0 0.0
    %561 = vmatpush2.msra.mxu0 0.0
    %562 = vmatprep.subr.mxu0 0.0
    %563 = vmatpush2.msra.mxu0 0.0
    %564 = vmatprep.mubr.f32.mxu0 0.0
    %565 = vmatmul.mubr.f32.gmra.mxu0 %v214
    %v566 = vpop.f32.mrf.mxu0
    %v567 = vadd.f32 %v192, %v566
    %v568 = vpop.f32.mrf.mxu0
    %v569 = vadd.f32 %v196, %v568
    %570 = vdwg.mxu0
    %571 = vmatprep.subr.mxu0 0.0
    %572 = vmatpush1.msra.mxu0 0.0
    %573 = vmatprep.subr.mxu0 0.0
    %574 = vmatpush1.msra.mxu0 0.0
    %575 = vmatprep.subr.mxu0 0.0
    %576 = vmatpush1.msra.mxu0 0.0
    %577 = vmatprep.subr.mxu0 0.0
    %578 = vmatpush1.msra.mxu0 0.0
    %579 = vmatprep.subr.mxu0 0.0
    %580 = vmatpush1.msra.mxu0 0.0
    %581 = vmatprep.subr.mxu0 0.0
    %582 = vmatpush1.msra.mxu0 0.0
    %583 = vmatprep.subr.mxu0 0.0
    %584 = vmatpush1.msra.mxu0 0.0
    %585 = vmatprep.subr.mxu0 0.0
    %586 = vmatpush1.msra.mxu0 0.0
    %587 = vmatprep.subr.mxu0 0.0
    %588 = vmatpush1.msra.mxu0 %v152
    %589 = vmatprep.subr.mxu0 0.0
    %590 = vmatpush1.msra.mxu0 %v141
    %591 = vmatprep.subr.mxu0 0.0
    %592 = vmatpush1.msra.mxu0 %v130
    %593 = vmatprep.subr.mxu0 0.0
    %594 = vmatpush1.msra.mxu0 %v119
    %595 = vmatprep.subr.mxu0 0.0
    %596 = vmatpush1.msra.mxu0 %v108
    %597 = vmatprep.subr.mxu0 0.0
    %598 = vmatpush1.msra.mxu0 %v97
    %599 = vmatprep.subr.mxu0 0.0
    %600 = vmatpush1.msra.mxu0 %v86
    %601 = vmatprep.subr.mxu0 0.0
    %602 = vmatpush1.msra.mxu0 %v75
    %603 = vmatprep.subr.mxu0 0.0
    %604 = vmatpush2.msra.mxu0 0.0
    %605 = vmatprep.subr.mxu0 0.0
    %606 = vmatpush2.msra.mxu0 0.0
    %607 = vmatprep.subr.mxu0 0.0
    %608 = vmatpush2.msra.mxu0 0.0
    %609 = vmatprep.subr.mxu0 0.0
    %610 = vmatpush2.msra.mxu0 0.0
    %611 = vmatprep.subr.mxu0 0.0
    %612 = vmatpush2.msra.mxu0 0.0
    %613 = vmatprep.subr.mxu0 0.0
    %614 = vmatpush2.msra.mxu0 0.0
    %615 = vmatprep.subr.mxu0 0.0
    %616 = vmatpush2.msra.mxu0 0.0
    %617 = vmatprep.subr.mxu0 0.0
    %618 = vmatpush2.msra.mxu0 0.0
    %619 = vmatprep.subr.mxu0 0.0
    %620 = vmatpush2.msra.mxu0 0.0
    %621 = vmatprep.subr.mxu0 0.0
    %622 = vmatpush2.msra.mxu0 0.0
    %623 = vmatprep.subr.mxu0 0.0
    %624 = vmatpush2.msra.mxu0 0.0
    %625 = vmatprep.subr.mxu0 0.0
    %626 = vmatpush2.msra.mxu0 0.0
    %627 = vmatprep.subr.mxu0 0.0
    %628 = vmatpush2.msra.mxu0 0.0
    %629 = vmatprep.subr.mxu0 0.0
    %630 = vmatpush2.msra.mxu0 0.0
    %631 = vmatprep.subr.mxu0 0.0
    %632 = vmatpush2.msra.mxu0 0.0
    %633 = vmatprep.subr.mxu0 0.0
    %634 = vmatpush2.msra.mxu0 0.0
    %635 = vmatprep.mubr.f32.mxu0 0.0
    %636 = vmatmul.mubr.f32.gmra.mxu0 %v214
    %v637 = vpop.f32.mrf.mxu0
    %v638 = vadd.f32 %v200, %v637
    %v639 = vpop.f32.mrf.mxu0
    %640 = vdwg.mxu0
    %v641 = vmax.f32 %v283, 0.0
    %v642 = vmax.f32 %v285, 0.0
    %v643 = vmax.f32 %v354, 0.0
    %v644 = vmax.f32 %v356, 0.0
    %v645 = vmax.f32 %v425, 0.0
    %v646 = vmax.f32 %v427, 0.0
    %v647 = vmax.f32 %v496, 0.0
    %v648 = vmax.f32 %v498, 0.0
    %v649 = vmax.f32 %v567, 0.0
    %v650 = vmax.f32 %v569, 0.0
    %v651 = vmax.f32 %v638, 0.0
    %v652 = vld [vmem:[#allocation5] sm:$0xff]
    %v653 = vld [vmem:[#allocation5 + $0x8] sm:$0xff]
    %v654 = vld [vmem:[#allocation5 + $0x10] sm:$0xff]
    %v655 = vld [vmem:[#allocation5 + $0x18] sm:$0xff]
    %v656 = vld [vmem:[#allocation5 + $0x20] sm:$0xff]
    %v657 = vld [vmem:[#allocation5 + $0x28] sm:$0xff]
    %v658 = vld [vmem:[#allocation5 + $0x30] sm:$0xff]
    %v659 = vld [vmem:[#allocation5 + $0x38] sm:$0xff]
    %v660 = vld [vmem:[#allocation5 + $0x40] sm:$0xff]
    %v661 = vld [vmem:[#allocation5 + $0x48] sm:$0xff]
    %v662 = vld [vmem:[#allocation5 + $0x50] sm:$0xff]
    %v663 = vld [vmem:[#allocation5 + $0x58] sm:$0xff]
    %v664 = vld [vmem:[#allocation5 + $0x60] sm:$0xff]
    %v665 = vld [vmem:[#allocation5 + $0x68] sm:$0xff]
    %v666 = vld [vmem:[#allocation5 + $0x70] sm:$0xff]
    %v667 = vld [vmem:[#allocation5 + $0x78] sm:$0xff]
    %v668 = vld [vmem:[#allocation5 + $0x80] sm:$0xff]
    %v669 = vld [vmem:[#allocation5 + $0x88] sm:$0xff]
    %v670 = vld [vmem:[#allocation5 + $0x90] sm:$0xff]
    %v671 = vld [vmem:[#allocation5 + $0x98] sm:$0xff]
    %v672 = vld [vmem:[#allocation5 + $0xa0] sm:$0xff]
    %v673 = vld [vmem:[#allocation5 + $0xa8] sm:$0xff]
    %v674 = vld [vmem:[#allocation5 + $0xb0] sm:$0xff]
    %v675 = vld [vmem:[#allocation5 + $0xb8] sm:$0xff]
    %v676 = vld [vmem:[#allocation5 + $0xc0] sm:$0xff]
    %v677 = vld [vmem:[#allocation5 + $0xc8] sm:$0xff]
    %v678 = vld [vmem:[#allocation5 + $0xd0] sm:$0xff]
    %v679 = vld [vmem:[#allocation5 + $0xd8] sm:$0xff]
    %v680 = vld [vmem:[#allocation5 + $0xe0] sm:$0xff]
    %v681 = vld [vmem:[#allocation5 + $0xe8] sm:$0xff]
    %v682 = vld [vmem:[#allocation5 + $0xf0] sm:$0xff]
    %v683 = vld [vmem:[#allocation5 + $0xf8] sm:$0xff]
    %v684 = vld [vmem:[#allocation5 + $0x100] sm:$0xff]
    %v685 = vld [vmem:[#allocation5 + $0x108] sm:$0xff]
    %v686 = vld [vmem:[#allocation5 + $0x110] sm:$0xff]
    %v687 = vld [vmem:[#allocation5 + $0x118] sm:$0xff]
    %v688 = vld [vmem:[#allocation5 + $0x120] sm:$0xff]
    %v689 = vld [vmem:[#allocation5 + $0x128] sm:$0xff]
    %v690 = vld [vmem:[#allocation5 + $0x130] sm:$0xff]
    %v691 = vld [vmem:[#allocation5 + $0x138] sm:$0xff]
    %v692 = vld [vmem:[#allocation5 + $0x140] sm:$0xff]
    %v693 = vld [vmem:[#allocation5 + $0x148] sm:$0xff]
    %v694 = vld [vmem:[#allocation5 + $0x150] sm:$0xff]
    %v695 = vld [vmem:[#allocation5 + $0x158] sm:$0xff]
    %v696 = vld [vmem:[#allocation5 + $0x160] sm:$0xff]
    %v697 = vld [vmem:[#allocation5 + $0x168] sm:$0xff]
    %v698 = vld [vmem:[#allocation5 + $0x170] sm:$0xff]
    %v699 = vld [vmem:[#allocation5 + $0x178] sm:$0xff]
    %v700 = vld [vmem:[#allocation5 + $0x180] sm:$0xff]
    %v701 = vld [vmem:[#allocation5 + $0x188] sm:$0xff]
    %v702 = vld [vmem:[#allocation5 + $0x190] sm:$0xff]
    %v703 = vld [vmem:[#allocation5 + $0x198] sm:$0xff]
    %v704 = vld [vmem:[#allocation5 + $0x1a0] sm:$0xff]
    %v705 = vld [vmem:[#allocation5 + $0x1a8] sm:$0xff]
    %v706 = vld [vmem:[#allocation5 + $0x1b0] sm:$0xff]
    %v707 = vld [vmem:[#allocation5 + $0x1b8] sm:$0xff]
    %v708 = vld [vmem:[#allocation5 + $0x1c0] sm:$0xff]
    %v709 = vld [vmem:[#allocation5 + $0x1c8] sm:$0xff]
    %v710 = vld [vmem:[#allocation5 + $0x1d0] sm:$0xff]
    %v711 = vld [vmem:[#allocation5 + $0x1d8] sm:$0xff]
    %v712 = vld [vmem:[#allocation5 + $0x1e0] sm:$0xff]
    %v713 = vld [vmem:[#allocation5 + $0x1e8] sm:$0xff]
    %v714 = vld [vmem:[#allocation5 + $0x1f0] sm:$0xff]
    %v715 = vld [vmem:[#allocation5 + $0x1f8] sm:$0xff]
    %v716 = vld [vmem:[#allocation5 + $0x200] sm:$0xff]
    %v717 = vld [vmem:[#allocation5 + $0x208] sm:$0xff]
    %v718 = vld [vmem:[#allocation5 + $0x210] sm:$0xff]
    %v719 = vld [vmem:[#allocation5 + $0x218] sm:$0xff]
    %v720 = vld [vmem:[#allocation5 + $0x220] sm:$0xff]
    %v721 = vld [vmem:[#allocation5 + $0x228] sm:$0xff]
    %v722 = vld [vmem:[#allocation5 + $0x230] sm:$0xff]
    %v723 = vld [vmem:[#allocation5 + $0x238] sm:$0xff]
    %v724 = vld [vmem:[#allocation5 + $0x240] sm:$0xff]
    %v725 = vld [vmem:[#allocation5 + $0x248] sm:$0xff]
    %v726 = vld [vmem:[#allocation5 + $0x250] sm:$0xff]
    %v727 = vld [vmem:[#allocation5 + $0x258] sm:$0xff]
    %v728 = vld [vmem:[#allocation5 + $0x260] sm:$0xff]
    %v729 = vld [vmem:[#allocation5 + $0x268] sm:$0xff]
    %v730 = vld [vmem:[#allocation5 + $0x270] sm:$0xff]
    %v731 = vld [vmem:[#allocation5 + $0x278] sm:$0xff]
    %v732 = vld [vmem:[#allocation5 + $0x280] sm:$0xff]
    %v733 = vld [vmem:[#allocation5 + $0x288] sm:$0xff]
    %v734 = vld [vmem:[#allocation5 + $0x290] sm:$0xff]
    %v735 = vld [vmem:[#allocation5 + $0x298] sm:$0xff]
    %v736 = vld [vmem:[#allocation5 + $0x2a0] sm:$0xff]
    %v737 = vld [vmem:[#allocation5 + $0x2a8] sm:$0xff]
    %v738 = vld [vmem:[#allocation5 + $0x2b0] sm:$0xff]
    %v739 = vld [vmem:[#allocation5 + $0x2b8] sm:$0xff]
    %v740 = vld [vmem:[#allocation5 + $0x2c0] sm:$0xff]
    %v741 = vld [vmem:[#allocation5 + $0x2c8] sm:$0xff]
    %v742 = vld [vmem:[#allocation5 + $0x2d0] sm:$0xff]
    %v743 = vld [vmem:[#allocation5 + $0x2d8] sm:$0xff]
    %v744 = vld [vmem:[#allocation5 + $0x2e0] sm:$0xff]
    %v745 = vld [vmem:[#allocation5 + $0x2e8] sm:$0xff]
    %v746 = vld [vmem:[#allocation5 + $0x2f0] sm:$0xff]
    %v747 = vld [vmem:[#allocation5 + $0x2f8] sm:$0xff]
    %v748 = vld [vmem:[#allocation5 + $0x300] sm:$0xff]
    %v749 = vld [vmem:[#allocation5 + $0x308] sm:$0xff]
    %v750 = vld [vmem:[#allocation5 + $0x310] sm:$0xff]
    %v751 = vld [vmem:[#allocation5 + $0x318] sm:$0xff]
    %v752 = vld [vmem:[#allocation5 + $0x320] sm:$0xff]
    %v753 = vld [vmem:[#allocation5 + $0x328] sm:$0xff]
    %v754 = vld [vmem:[#allocation5 + $0x330] sm:$0xff]
    %v755 = vld [vmem:[#allocation5 + $0x338] sm:$0xff]
    %v756 = vld [vmem:[#allocation5 + $0x340] sm:$0xff]
    %v757 = vld [vmem:[#allocation5 + $0x348] sm:$0xff]
    %v758 = vld [vmem:[#allocation5 + $0x350] sm:$0xff]
    %v759 = vld [vmem:[#allocation5 + $0x358] sm:$0xff]
    %v760 = vld [vmem:[#allocation5 + $0x360] sm:$0xff]
    %v761 = vld [vmem:[#allocation5 + $0x368] sm:$0xff]
    %v762 = vld [vmem:[#allocation5 + $0x370] sm:$0xff]
    %v763 = vld [vmem:[#allocation5 + $0x378] sm:$0xff]
    %v764 = vld [vmem:[#allocation5 + $0x380] sm:$0xff]
    %v765 = vld [vmem:[#allocation5 + $0x388] sm:$0xff]
    %v766 = vld [vmem:[#allocation5 + $0x390] sm:$0xff]
    %v767 = vld [vmem:[#allocation5 + $0x398] sm:$0xff]
    %v768 = vld [vmem:[#allocation5 + $0x3a0] sm:$0xff]
    %v769 = vld [vmem:[#allocation5 + $0x3a8] sm:$0xff]
    %v770 = vld [vmem:[#allocation5 + $0x3b0] sm:$0xff]
    %v771 = vld [vmem:[#allocation5 + $0x3b8] sm:$0xff]
    %v772 = vld [vmem:[#allocation5 + $0x3c0] sm:$0xff]
    %v773 = vld [vmem:[#allocation5 + $0x3c8] sm:$0xff]
    %v774 = vld [vmem:[#allocation5 + $0x3d0] sm:$0xff]
    %v775 = vld [vmem:[#allocation5 + $0x3d8] sm:$0xff]
    %v776 = vld [vmem:[#allocation5 + $0x3e0] sm:$0xff]
    %v777 = vld [vmem:[#allocation5 + $0x3e8] sm:$0xff]
    %v778 = vld [vmem:[#allocation5 + $0x3f0] sm:$0xff]
    %v779 = vld [vmem:[#allocation5 + $0x3f8] sm:$0xff]
    %v780 = vld [vmem:[#allocation5 + $0x400] sm:$0xff]
    %v781 = vld [vmem:[#allocation5 + $0x408] sm:$0xff]
    %v782 = vld [vmem:[#allocation5 + $0x410] sm:$0xff]
    %v783 = vld [vmem:[#allocation5 + $0x418] sm:$0xff]
    %v784 = vld [vmem:[#allocation5 + $0x420] sm:$0xff]
    %v785 = vld [vmem:[#allocation5 + $0x428] sm:$0xff]
    %v786 = vld [vmem:[#allocation5 + $0x430] sm:$0xff]
    %v787 = vld [vmem:[#allocation5 + $0x438] sm:$0xff]
    %v788 = vld [vmem:[#allocation5 + $0x440] sm:$0xff]
    %v789 = vld [vmem:[#allocation5 + $0x448] sm:$0xff]
    %v790 = vld [vmem:[#allocation5 + $0x450] sm:$0xff]
    %v791 = vld [vmem:[#allocation5 + $0x458] sm:$0xff]
    %v792 = vld [vmem:[#allocation5 + $0x460] sm:$0xff]
    %v793 = vld [vmem:[#allocation5 + $0x468] sm:$0xff]
    %v794 = vld [vmem:[#allocation5 + $0x470] sm:$0xff]
    %v795 = vld [vmem:[#allocation5 + $0x478] sm:$0xff]
    %v796 = vld [vmem:[#allocation5 + $0x480] sm:$0xff]
    %v797 = vld [vmem:[#allocation5 + $0x488] sm:$0xff]
    %v798 = vld [vmem:[#allocation5 + $0x490] sm:$0xff]
    %v799 = vld [vmem:[#allocation5 + $0x498] sm:$0xff]
    %v800 = vld [vmem:[#allocation5 + $0x4a0] sm:$0xff]
    %v801 = vld [vmem:[#allocation5 + $0x4a8] sm:$0xff]
    %v802 = vld [vmem:[#allocation5 + $0x4b0] sm:$0xff]
    %v803 = vld [vmem:[#allocation5 + $0x4b8] sm:$0xff]
    %v804 = vld [vmem:[#allocation5 + $0x4c0] sm:$0xff]
    %v805 = vld [vmem:[#allocation5 + $0x4c8] sm:$0xff]
    %v806 = vld [vmem:[#allocation5 + $0x4d0] sm:$0xff]
    %v807 = vld [vmem:[#allocation5 + $0x4d8] sm:$0xff]
    %v808 = vld [vmem:[#allocation5 + $0x4e0] sm:$0xff]
    %v809 = vld [vmem:[#allocation5 + $0x4e8] sm:$0xff]
    %v810 = vld [vmem:[#allocation5 + $0x4f0] sm:$0xff]
    %v811 = vld [vmem:[#allocation5 + $0x4f8] sm:$0xff]
    %v812 = vld [vmem:[%s4] sm:$0x1]
    %v814 = vlaneseq
    %v815 = vshrl.u32 %v814, 7
    %v816 = vsub.s32 0, %v815
    %v817 = vrot.slane %v812, %v816
    %819 = vmatprep.subr.mxu0 0.0
    %820 = vmatpush1.msra.mxu0 %v667
    %821 = vmatprep.subr.mxu0 0.0
    %822 = vmatpush1.msra.mxu0 %v666
    %823 = vmatprep.subr.mxu0 0.0
    %824 = vmatpush1.msra.mxu0 %v665
    %825 = vmatprep.subr.mxu0 0.0
    %826 = vmatpush1.msra.mxu0 %v664
    %827 = vmatprep.subr.mxu0 0.0
    %828 = vmatpush1.msra.mxu0 %v663
    %829 = vmatprep.subr.mxu0 0.0
    %830 = vmatpush1.msra.mxu0 %v662
    %831 = vmatprep.subr.mxu0 0.0
    %832 = vmatpush1.msra.mxu0 %v661
    %833 = vmatprep.subr.mxu0 0.0
    %834 = vmatpush1.msra.mxu0 %v660
    %835 = vmatprep.subr.mxu0 0.0
    %836 = vmatpush1.msra.mxu0 %v659
    %837 = vmatprep.subr.mxu0 0.0
    %838 = vmatpush1.msra.mxu0 %v658
    %839 = vmatprep.subr.mxu0 0.0
    %840 = vmatpush1.msra.mxu0 %v657
    %841 = vmatprep.subr.mxu0 0.0
    %842 = vmatpush1.msra.mxu0 %v656
    %843 = vmatprep.subr.mxu0 0.0
    %844 = vmatpush1.msra.mxu0 %v655
    %845 = vmatprep.subr.mxu0 0.0
    %846 = vmatpush1.msra.mxu0 %v654
    %847 = vmatprep.subr.mxu0 0.0
    %848 = vmatpush1.msra.mxu0 %v653
    %849 = vmatprep.subr.mxu0 0.0
    %850 = vmatpush1.msra.mxu0 %v652
    %851 = vmatprep.subr.mxu0 0.0
    %852 = vmatpush2.msra.mxu0 %v683
    %853 = vmatprep.subr.mxu0 0.0
    %854 = vmatpush2.msra.mxu0 %v682
    %855 = vmatprep.subr.mxu0 0.0
    %856 = vmatpush2.msra.mxu0 %v681
    %857 = vmatprep.subr.mxu0 0.0
    %858 = vmatpush2.msra.mxu0 %v680
    %859 = vmatprep.subr.mxu0 0.0
    %860 = vmatpush2.msra.mxu0 %v679
    %861 = vmatprep.subr.mxu0 0.0
    %862 = vmatpush2.msra.mxu0 %v678
    %863 = vmatprep.subr.mxu0 0.0
    %864 = vmatpush2.msra.mxu0 %v677
    %865 = vmatprep.subr.mxu0 0.0
    %866 = vmatpush2.msra.mxu0 %v676
    %867 = vmatprep.subr.mxu0 0.0
    %868 = vmatpush2.msra.mxu0 %v675
    %869 = vmatprep.subr.mxu0 0.0
    %870 = vmatpush2.msra.mxu0 %v674
    %871 = vmatprep.subr.mxu0 0.0
    %872 = vmatpush2.msra.mxu0 %v673
    %873 = vmatprep.subr.mxu0 0.0
    %874 = vmatpush2.msra.mxu0 %v672
    %875 = vmatprep.subr.mxu0 0.0
    %876 = vmatpush2.msra.mxu0 %v671
    %877 = vmatprep.subr.mxu0 0.0
    %878 = vmatpush2.msra.mxu0 %v670
    %879 = vmatprep.subr.mxu0 0.0
    %880 = vmatpush2.msra.mxu0 %v669
    %881 = vmatprep.subr.mxu0 0.0
    %882 = vmatpush2.msra.mxu0 %v668
    %883 = vmatprep.mubr.f32.mxu0 %v643
    %884 = vmatmul.mubr.f32.gmra.mxu0 %v642
    %v885 = vpop.f32.mrf.mxu0
    %v886 = vadd.f32 %v817, %v885
    %v887 = vpop.f32.mrf.mxu0
    %888 = vdwg.mxu0
    %889 = vmatprep.subr.mxu0 0.0
    %890 = vmatpush1.msra.mxu0 %v699
    %891 = vmatprep.subr.mxu0 0.0
    %892 = vmatpush1.msra.mxu0 %v698
    %893 = vmatprep.subr.mxu0 0.0
    %894 = vmatpush1.msra.mxu0 %v697
    %895 = vmatprep.subr.mxu0 0.0
    %896 = vmatpush1.msra.mxu0 %v696
    %897 = vmatprep.subr.mxu0 0.0
    %898 = vmatpush1.msra.mxu0 %v695
    %899 = vmatprep.subr.mxu0 0.0
    %900 = vmatpush1.msra.mxu0 %v694
    %901 = vmatprep.subr.mxu0 0.0
    %902 = vmatpush1.msra.mxu0 %v693
    %903 = vmatprep.subr.mxu0 0.0
    %904 = vmatpush1.msra.mxu0 %v692
    %905 = vmatprep.subr.mxu0 0.0
    %906 = vmatpush1.msra.mxu0 %v691
    %907 = vmatprep.subr.mxu0 0.0
    %908 = vmatpush1.msra.mxu0 %v690
    %909 = vmatprep.subr.mxu0 0.0
    %910 = vmatpush1.msra.mxu0 %v689
    %911 = vmatprep.subr.mxu0 0.0
    %912 = vmatpush1.msra.mxu0 %v688
    %913 = vmatprep.subr.mxu0 0.0
    %914 = vmatpush1.msra.mxu0 %v687
    %915 = vmatprep.subr.mxu0 0.0
    %916 = vmatpush1.msra.mxu0 %v686
    %917 = vmatprep.subr.mxu0 0.0
    %918 = vmatpush1.msra.mxu0 %v685
    %919 = vmatprep.subr.mxu0 0.0
    %920 = vmatpush1.msra.mxu0 %v684
    %921 = vmatprep.subr.mxu0 0.0
    %922 = vmatpush2.msra.mxu0 %v715
    %923 = vmatprep.subr.mxu0 0.0
    %924 = vmatpush2.msra.mxu0 %v714
    %925 = vmatprep.subr.mxu0 0.0
    %926 = vmatpush2.msra.mxu0 %v713
    %927 = vmatprep.subr.mxu0 0.0
    %928 = vmatpush2.msra.mxu0 %v712
    %929 = vmatprep.subr.mxu0 0.0
    %930 = vmatpush2.msra.mxu0 %v711
    %931 = vmatprep.subr.mxu0 0.0
    %932 = vmatpush2.msra.mxu0 %v710
    %933 = vmatprep.subr.mxu0 0.0
    %934 = vmatpush2.msra.mxu0 %v709
    %935 = vmatprep.subr.mxu0 0.0
    %936 = vmatpush2.msra.mxu0 %v708
    %937 = vmatprep.subr.mxu0 0.0
    %938 = vmatpush2.msra.mxu0 %v707
    %939 = vmatprep.subr.mxu0 0.0
    %940 = vmatpush2.msra.mxu0 %v706
    %941 = vmatprep.subr.mxu0 0.0
    %942 = vmatpush2.msra.mxu0 %v705
    %943 = vmatprep.subr.mxu0 0.0
    %944 = vmatpush2.msra.mxu0 %v704
    %945 = vmatprep.subr.mxu0 0.0
    %946 = vmatpush2.msra.mxu0 %v703
    %947 = vmatprep.subr.mxu0 0.0
    %948 = vmatpush2.msra.mxu0 %v702
    %949 = vmatprep.subr.mxu0 0.0
    %950 = vmatpush2.msra.mxu0 %v701
    %951 = vmatprep.subr.mxu0 0.0
    %952 = vmatpush2.msra.mxu0 %v700
    %953 = vmatprep.mubr.f32.mxu0 %v645
    %954 = vmatmul.mubr.f32.gmra.mxu0 %v644
    %v955 = vpop.f32.mrf.mxu0
    %v956 = vadd.f32 %v886, %v955
    %v957 = vpop.f32.mrf.mxu0
    %958 = vdwg.mxu0
    %959 = vmatprep.subr.mxu0 0.0
    %960 = vmatpush1.msra.mxu0 %v731
    %961 = vmatprep.subr.mxu0 0.0
    %962 = vmatpush1.msra.mxu0 %v730
    %963 = vmatprep.subr.mxu0 0.0
    %964 = vmatpush1.msra.mxu0 %v729
    %965 = vmatprep.subr.mxu0 0.0
    %966 = vmatpush1.msra.mxu0 %v728
    %967 = vmatprep.subr.mxu0 0.0
    %968 = vmatpush1.msra.mxu0 %v727
    %969 = vmatprep.subr.mxu0 0.0
    %970 = vmatpush1.msra.mxu0 %v726
    %971 = vmatprep.subr.mxu0 0.0
    %972 = vmatpush1.msra.mxu0 %v725
    %973 = vmatprep.subr.mxu0 0.0
    %974 = vmatpush1.msra.mxu0 %v724
    %975 = vmatprep.subr.mxu0 0.0
    %976 = vmatpush1.msra.mxu0 %v723
    %977 = vmatprep.subr.mxu0 0.0
    %978 = vmatpush1.msra.mxu0 %v722
    %979 = vmatprep.subr.mxu0 0.0
    %980 = vmatpush1.msra.mxu0 %v721
    %981 = vmatprep.subr.mxu0 0.0
    %982 = vmatpush1.msra.mxu0 %v720
    %983 = vmatprep.subr.mxu0 0.0
    %984 = vmatpush1.msra.mxu0 %v719
    %985 = vmatprep.subr.mxu0 0.0
    %986 = vmatpush1.msra.mxu0 %v718
    %987 = vmatprep.subr.mxu0 0.0
    %988 = vmatpush1.msra.mxu0 %v717
    %989 = vmatprep.subr.mxu0 0.0
    %990 = vmatpush1.msra.mxu0 %v716
    %991 = vmatprep.subr.mxu0 0.0
    %992 = vmatpush2.msra.mxu0 %v747
    %993 = vmatprep.subr.mxu0 0.0
    %994 = vmatpush2.msra.mxu0 %v746
    %995 = vmatprep.subr.mxu0 0.0
    %996 = vmatpush2.msra.mxu0 %v745
    %997 = vmatprep.subr.mxu0 0.0
    %998 = vmatpush2.msra.mxu0 %v744
    %999 = vmatprep.subr.mxu0 0.0
    %1000 = vmatpush2.msra.mxu0 %v743
    %1001 = vmatprep.subr.mxu0 0.0
    %1002 = vmatpush2.msra.mxu0 %v742
    %1003 = vmatprep.subr.mxu0 0.0
    %1004 = vmatpush2.msra.mxu0 %v741
    %1005 = vmatprep.subr.mxu0 0.0
    %1006 = vmatpush2.msra.mxu0 %v740
    %1007 = vmatprep.subr.mxu0 0.0
    %1008 = vmatpush2.msra.mxu0 %v739
    %1009 = vmatprep.subr.mxu0 0.0
    %1010 = vmatpush2.msra.mxu0 %v738
    %1011 = vmatprep.subr.mxu0 0.0
    %1012 = vmatpush2.msra.mxu0 %v737
    %1013 = vmatprep.subr.mxu0 0.0
    %1014 = vmatpush2.msra.mxu0 %v736
    %1015 = vmatprep.subr.mxu0 0.0
    %1016 = vmatpush2.msra.mxu0 %v735
    %1017 = vmatprep.subr.mxu0 0.0
    %1018 = vmatpush2.msra.mxu0 %v734
    %1019 = vmatprep.subr.mxu0 0.0
    %1020 = vmatpush2.msra.mxu0 %v733
    %1021 = vmatprep.subr.mxu0 0.0
    %1022 = vmatpush2.msra.mxu0 %v732
    %1023 = vmatprep.mubr.f32.mxu0 %v647
    %1024 = vmatmul.mubr.f32.gmra.mxu0 %v646
    %v1025 = vpop.f32.mrf.mxu0
    %v1026 = vadd.f32 %v956, %v1025
    %v1027 = vpop.f32.mrf.mxu0
    %1028 = vdwg.mxu0
    %1029 = vmatprep.subr.mxu0 0.0
    %1030 = vmatpush1.msra.mxu0 %v763
    %1031 = vmatprep.subr.mxu0 0.0
    %1032 = vmatpush1.msra.mxu0 %v762
    %1033 = vmatprep.subr.mxu0 0.0
    %1034 = vmatpush1.msra.mxu0 %v761
    %1035 = vmatprep.subr.mxu0 0.0
    %1036 = vmatpush1.msra.mxu0 %v760
    %1037 = vmatprep.subr.mxu0 0.0
    %1038 = vmatpush1.msra.mxu0 %v759
    %1039 = vmatprep.subr.mxu0 0.0
    %1040 = vmatpush1.msra.mxu0 %v758
    %1041 = vmatprep.subr.mxu0 0.0
    %1042 = vmatpush1.msra.mxu0 %v757
    %1043 = vmatprep.subr.mxu0 0.0
    %1044 = vmatpush1.msra.mxu0 %v756
    %1045 = vmatprep.subr.mxu0 0.0
    %1046 = vmatpush1.msra.mxu0 %v755
    %1047 = vmatprep.subr.mxu0 0.0
    %1048 = vmatpush1.msra.mxu0 %v754
    %1049 = vmatprep.subr.mxu0 0.0
    %1050 = vmatpush1.msra.mxu0 %v753
    %1051 = vmatprep.subr.mxu0 0.0
    %1052 = vmatpush1.msra.mxu0 %v752
    %1053 = vmatprep.subr.mxu0 0.0
    %1054 = vmatpush1.msra.mxu0 %v751
    %1055 = vmatprep.subr.mxu0 0.0
    %1056 = vmatpush1.msra.mxu0 %v750
    %1057 = vmatprep.subr.mxu0 0.0
    %1058 = vmatpush1.msra.mxu0 %v749
    %1059 = vmatprep.subr.mxu0 0.0
    %1060 = vmatpush1.msra.mxu0 %v748
    %1061 = vmatprep.subr.mxu0 0.0
    %1062 = vmatpush2.msra.mxu0 %v779
    %1063 = vmatprep.subr.mxu0 0.0
    %1064 = vmatpush2.msra.mxu0 %v778
    %1065 = vmatprep.subr.mxu0 0.0
    %1066 = vmatpush2.msra.mxu0 %v777
    %1067 = vmatprep.subr.mxu0 0.0
    %1068 = vmatpush2.msra.mxu0 %v776
    %1069 = vmatprep.subr.mxu0 0.0
    %1070 = vmatpush2.msra.mxu0 %v775
    %1071 = vmatprep.subr.mxu0 0.0
    %1072 = vmatpush2.msra.mxu0 %v774
    %1073 = vmatprep.subr.mxu0 0.0
    %1074 = vmatpush2.msra.mxu0 %v773
    %1075 = vmatprep.subr.mxu0 0.0
    %1076 = vmatpush2.msra.mxu0 %v772
    %1077 = vmatprep.subr.mxu0 0.0
    %1078 = vmatpush2.msra.mxu0 %v771
    %1079 = vmatprep.subr.mxu0 0.0
    %1080 = vmatpush2.msra.mxu0 %v770
    %1081 = vmatprep.subr.mxu0 0.0
    %1082 = vmatpush2.msra.mxu0 %v769
    %1083 = vmatprep.subr.mxu0 0.0
    %1084 = vmatpush2.msra.mxu0 %v768
    %1085 = vmatprep.subr.mxu0 0.0
    %1086 = vmatpush2.msra.mxu0 %v767
    %1087 = vmatprep.subr.mxu0 0.0
    %1088 = vmatpush2.msra.mxu0 %v766
    %1089 = vmatprep.subr.mxu0 0.0
    %1090 = vmatpush2.msra.mxu0 %v765
    %1091 = vmatprep.subr.mxu0 0.0
    %1092 = vmatpush2.msra.mxu0 %v764
    %1093 = vmatprep.mubr.f32.mxu0 %v649
    %1094 = vmatmul.mubr.f32.gmra.mxu0 %v648
    %v1095 = vpop.f32.mrf.mxu0
    %v1096 = vadd.f32 %v1026, %v1095
    %v1097 = vpop.f32.mrf.mxu0
    %1098 = vdwg.mxu0
    %1099 = vmatprep.subr.mxu0 0.0
    %1100 = vmatpush1.msra.mxu0 %v795
    %1101 = vmatprep.subr.mxu0 0.0
    %1102 = vmatpush1.msra.mxu0 %v794
    %1103 = vmatprep.subr.mxu0 0.0
    %1104 = vmatpush1.msra.mxu0 %v793
    %1105 = vmatprep.subr.mxu0 0.0
    %1106 = vmatpush1.msra.mxu0 %v792
    %1107 = vmatprep.subr.mxu0 0.0
    %1108 = vmatpush1.msra.mxu0 %v791
    %1109 = vmatprep.subr.mxu0 0.0
    %1110 = vmatpush1.msra.mxu0 %v790
    %1111 = vmatprep.subr.mxu0 0.0
    %1112 = vmatpush1.msra.mxu0 %v789
    %1113 = vmatprep.subr.mxu0 0.0
    %1114 = vmatpush1.msra.mxu0 %v788
    %1115 = vmatprep.subr.mxu0 0.0
    %1116 = vmatpush1.msra.mxu0 %v787
    %1117 = vmatprep.subr.mxu0 0.0
    %1118 = vmatpush1.msra.mxu0 %v786
    %1119 = vmatprep.subr.mxu0 0.0
    %1120 = vmatpush1.msra.mxu0 %v785
    %1121 = vmatprep.subr.mxu0 0.0
    %1122 = vmatpush1.msra.mxu0 %v784
    %1123 = vmatprep.subr.mxu0 0.0
    %1124 = vmatpush1.msra.mxu0 %v783
    %1125 = vmatprep.subr.mxu0 0.0
    %1126 = vmatpush1.msra.mxu0 %v782
    %1127 = vmatprep.subr.mxu0 0.0
    %1128 = vmatpush1.msra.mxu0 %v781
    %1129 = vmatprep.subr.mxu0 0.0
    %1130 = vmatpush1.msra.mxu0 %v780
    %1131 = vmatprep.subr.mxu0 0.0
    %1132 = vmatpush2.msra.mxu0 %v811
    %1133 = vmatprep.subr.mxu0 0.0
    %1134 = vmatpush2.msra.mxu0 %v810
    %1135 = vmatprep.subr.mxu0 0.0
    %1136 = vmatpush2.msra.mxu0 %v809
    %1137 = vmatprep.subr.mxu0 0.0
    %1138 = vmatpush2.msra.mxu0 %v808
    %1139 = vmatprep.subr.mxu0 0.0
    %1140 = vmatpush2.msra.mxu0 %v807
    %1141 = vmatprep.subr.mxu0 0.0
    %1142 = vmatpush2.msra.mxu0 %v806
    %1143 = vmatprep.subr.mxu0 0.0
    %1144 = vmatpush2.msra.mxu0 %v805
    %1145 = vmatprep.subr.mxu0 0.0
    %1146 = vmatpush2.msra.mxu0 %v804
    %1147 = vmatprep.subr.mxu0 0.0
    %1148 = vmatpush2.msra.mxu0 %v803
    %1149 = vmatprep.subr.mxu0 0.0
    %1150 = vmatpush2.msra.mxu0 %v802
    %1151 = vmatprep.subr.mxu0 0.0
    %1152 = vmatpush2.msra.mxu0 %v801
    %1153 = vmatprep.subr.mxu0 0.0
    %1154 = vmatpush2.msra.mxu0 %v800
    %1155 = vmatprep.subr.mxu0 0.0
    %1156 = vmatpush2.msra.mxu0 %v799
    %1157 = vmatprep.subr.mxu0 0.0
    %1158 = vmatpush2.msra.mxu0 %v798
    %1159 = vmatprep.subr.mxu0 0.0
    %1160 = vmatpush2.msra.mxu0 %v797
    %1161 = vmatprep.subr.mxu0 0.0
    %1162 = vmatpush2.msra.mxu0 %v796
    %1163 = vmatprep.mubr.f32.mxu0 %v651
    %1164 = vmatmul.mubr.f32.gmra.mxu0 %v650
    %v1165 = vpop.f32.mrf.mxu0
    %v1166 = vadd.f32 %v1096, %v1165
    %v1167 = vpop.f32.mrf.mxu0
    %1168 = vdwg.mxu0
    %v1169 = vmax.f32 %v1166, 0.0
    %v1170 = vld [vmem:[%s5] sm:$0xff]
    %v1171 = vld [vmem:[%s5 + $0x8] sm:$0xff]
    %v1172 = vld [vmem:[%s5 + $0x10] sm:$0xff]
    %v1173 = vld [vmem:[%s5 + $0x18] sm:$0xff]
    %v1174 = vld [vmem:[%s5 + $0x20] sm:$0xff]
    %v1175 = vld [vmem:[%s5 + $0x28] sm:$0xff]
    %v1176 = vld [vmem:[%s5 + $0x30] sm:$0xff]
    %v1177 = vld [vmem:[%s5 + $0x38] sm:$0xff]
    %v1178 = vld [vmem:[%s5 + $0x40] sm:$0xff]
    %v1179 = vld [vmem:[%s5 + $0x48] sm:$0xff]
    %v1180 = vld [vmem:[%s5 + $0x50] sm:$0xff]
    %v1181 = vld [vmem:[%s5 + $0x58] sm:$0xff]
    %v1182 = vld [vmem:[%s5 + $0x60] sm:$0xff]
    %v1183 = vld [vmem:[%s5 + $0x68] sm:$0xff]
    %v1184 = vld [vmem:[%s5 + $0x70] sm:$0xff]
    %v1185 = vld [vmem:[%s5 + $0x78] sm:$0xff]
    %v1186 = vld [vmem:[%s6] sm:$0xff]
    %v1187 = vld [vmem:[%s6 + $0x8] sm:$0xff]
    %v1188 = vld [vmem:[%s6 + $0x10] sm:$0xff]
    %v1189 = vld [vmem:[%s6 + $0x18] sm:$0xff]
    %v1190 = vld [vmem:[%s6 + $0x20] sm:$0xff]
    %v1191 = vld [vmem:[%s6 + $0x28] sm:$0xff]
    %v1192 = vld [vmem:[%s6 + $0x30] sm:$0xff]
    %v1193 = vld [vmem:[%s6 + $0x38] sm:$0xff]
    %v1194 = vld [vmem:[%s6 + $0x40] sm:$0xff]
    %v1195 = vld [vmem:[%s6 + $0x48] sm:$0xff]
    %v1196 = vld [vmem:[%s6 + $0x50] sm:$0xff]
    %v1197 = vld [vmem:[%s6 + $0x58] sm:$0xff]
    %v1198 = vld [vmem:[%s6 + $0x60] sm:$0xff]
    %v1199 = vld [vmem:[%s6 + $0x68] sm:$0xff]
    %v1200 = vld [vmem:[%s6 + $0x70] sm:$0xff]
    %v1201 = vld [vmem:[%s6 + $0x78] sm:$0xff]
    %1202 = vmatprep.subr.mxu0 0.0
    %1203 = vmatpush1.msra.mxu0 %v1201
    %1204 = vmatprep.subr.mxu0 0.0
    %1205 = vmatpush1.msra.mxu0 %v1200
    %1206 = vmatprep.subr.mxu0 0.0
    %1207 = vmatpush1.msra.mxu0 %v1199
    %1208 = vmatprep.subr.mxu0 0.0
    %1209 = vmatpush1.msra.mxu0 %v1198
    %1210 = vmatprep.subr.mxu0 0.0
    %1211 = vmatpush1.msra.mxu0 %v1197
    %1212 = vmatprep.subr.mxu0 0.0
    %1213 = vmatpush1.msra.mxu0 %v1196
    %1214 = vmatprep.subr.mxu0 0.0
    %1215 = vmatpush1.msra.mxu0 %v1195
    %1216 = vmatprep.subr.mxu0 0.0
    %1217 = vmatpush1.msra.mxu0 %v1194
    %1218 = vmatprep.subr.mxu0 0.0
    %1219 = vmatpush1.msra.mxu0 %v1193
    %1220 = vmatprep.subr.mxu0 0.0
    %1221 = vmatpush1.msra.mxu0 %v1192
    %1222 = vmatprep.subr.mxu0 0.0
    %1223 = vmatpush1.msra.mxu0 %v1191
    %1224 = vmatprep.subr.mxu0 0.0
    %1225 = vmatpush1.msra.mxu0 %v1190
    %1226 = vmatprep.subr.mxu0 0.0
    %1227 = vmatpush1.msra.mxu0 %v1189
    %1228 = vmatprep.subr.mxu0 0.0
    %1229 = vmatpush1.msra.mxu0 %v1188
    %1230 = vmatprep.subr.mxu0 0.0
    %1231 = vmatpush1.msra.mxu0 %v1187
    %1232 = vmatprep.subr.mxu0 0.0
    %1233 = vmatpush1.msra.mxu0 %v1186
    %1234 = vmatprep.subr.mxu0 0.0
    %1235 = vmatpush2.msra.mxu0 0.0
    %1236 = vmatprep.subr.mxu0 0.0
    %1237 = vmatpush2.msra.mxu0 0.0
    %1238 = vmatprep.subr.mxu0 0.0
    %1239 = vmatpush2.msra.mxu0 0.0
    %1240 = vmatprep.subr.mxu0 0.0
    %1241 = vmatpush2.msra.mxu0 0.0
    %1242 = vmatprep.subr.mxu0 0.0
    %1243 = vmatpush2.msra.mxu0 0.0
    %1244 = vmatprep.subr.mxu0 0.0
    %1245 = vmatpush2.msra.mxu0 0.0
    %1246 = vmatprep.subr.mxu0 0.0
    %1247 = vmatpush2.msra.mxu0 0.0
    %1248 = vmatprep.subr.mxu0 0.0
    %1249 = vmatpush2.msra.mxu0 0.0
    %1250 = vmatprep.subr.mxu0 0.0
    %1251 = vmatpush2.msra.mxu0 0.0
    %1252 = vmatprep.subr.mxu0 0.0
    %1253 = vmatpush2.msra.mxu0 0.0
    %1254 = vmatprep.subr.mxu0 0.0
    %1255 = vmatpush2.msra.mxu0 0.0
    %1256 = vmatprep.subr.mxu0 0.0
    %1257 = vmatpush2.msra.mxu0 0.0
    %1258 = vmatprep.subr.mxu0 0.0
    %1259 = vmatpush2.msra.mxu0 0.0
    %1260 = vmatprep.subr.mxu0 0.0
    %1261 = vmatpush2.msra.mxu0 0.0
    %1262 = vmatprep.subr.mxu0 0.0
    %1263 = vmatpush2.msra.mxu0 0.0
    %1264 = vmatprep.subr.mxu0 0.0
    %1265 = vmatpush2.msra.mxu0 0.0
    %1266 = vmatprep.mubr.f32.mxu0 0.0
    %1267 = vmatmul.mubr.f32.gmra.mxu0 %v1169
    %v1268 = vpop.f32.mrf.mxu0
    %v1269 = vadd.f32 0.0, %v1268
    %v1270 = vpop.f32.mrf.mxu0
    %1271 = vdwg.mxu0
    %1272 = vmatprep.subr.mxu0 0.0
    %1273 = vmatpush1.msra.mxu0 %v1185
    %1274 = vmatprep.subr.mxu0 0.0
    %1275 = vmatpush1.msra.mxu0 %v1184
    %1276 = vmatprep.subr.mxu0 0.0
    %1277 = vmatpush1.msra.mxu0 %v1183
    %1278 = vmatprep.subr.mxu0 0.0
    %1279 = vmatpush1.msra.mxu0 %v1182
    %1280 = vmatprep.subr.mxu0 0.0
    %1281 = vmatpush1.msra.mxu0 %v1181
    %1282 = vmatprep.subr.mxu0 0.0
    %1283 = vmatpush1.msra.mxu0 %v1180
    %1284 = vmatprep.subr.mxu0 0.0
    %1285 = vmatpush1.msra.mxu0 %v1179
    %1286 = vmatprep.subr.mxu0 0.0
    %1287 = vmatpush1.msra.mxu0 %v1178
    %1288 = vmatprep.subr.mxu0 0.0
    %1289 = vmatpush1.msra.mxu0 %v1177
    %1290 = vmatprep.subr.mxu0 0.0
    %1291 = vmatpush1.msra.mxu0 %v1176
    %1292 = vmatprep.subr.mxu0 0.0
    %1293 = vmatpush1.msra.mxu0 %v1175
    %1294 = vmatprep.subr.mxu0 0.0
    %1295 = vmatpush1.msra.mxu0 %v1174
    %1296 = vmatprep.subr.mxu0 0.0
    %1297 = vmatpush1.msra.mxu0 %v1173
    %1298 = vmatprep.subr.mxu0 0.0
    %1299 = vmatpush1.msra.mxu0 %v1172
    %1300 = vmatprep.subr.mxu0 0.0
    %1301 = vmatpush1.msra.mxu0 %v1171
    %1302 = vmatprep.subr.mxu0 0.0
    %1303 = vmatpush1.msra.mxu0 %v1170
    %1304 = vmatprep.subr.mxu0 0.0
    %1305 = vmatpush2.msra.mxu0 0.0
    %1306 = vmatprep.subr.mxu0 0.0
    %1307 = vmatpush2.msra.mxu0 0.0
    %1308 = vmatprep.subr.mxu0 0.0
    %1309 = vmatpush2.msra.mxu0 0.0
    %1310 = vmatprep.subr.mxu0 0.0
    %1311 = vmatpush2.msra.mxu0 0.0
    %1312 = vmatprep.subr.mxu0 0.0
    %1313 = vmatpush2.msra.mxu0 0.0
    %1314 = vmatprep.subr.mxu0 0.0
    %1315 = vmatpush2.msra.mxu0 0.0
    %1316 = vmatprep.subr.mxu0 0.0
    %1317 = vmatpush2.msra.mxu0 0.0
    %1318 = vmatprep.subr.mxu0 0.0
    %1319 = vmatpush2.msra.mxu0 0.0
    %1320 = vmatprep.subr.mxu0 0.0
    %1321 = vmatpush2.msra.mxu0 0.0
    %1322 = vmatprep.subr.mxu0 0.0
    %1323 = vmatpush2.msra.mxu0 0.0
    %1324 = vmatprep.subr.mxu0 0.0
    %1325 = vmatpush2.msra.mxu0 0.0
    %1326 = vmatprep.subr.mxu0 0.0
    %1327 = vmatpush2.msra.mxu0 0.0
    %1328 = vmatprep.subr.mxu0 0.0
    %1329 = vmatpush2.msra.mxu0 0.0
    %1330 = vmatprep.subr.mxu0 0.0
    %1331 = vmatpush2.msra.mxu0 0.0
    %1332 = vmatprep.subr.mxu0 0.0
    %1333 = vmatpush2.msra.mxu0 0.0
    %1334 = vmatprep.subr.mxu0 0.0
    %1335 = vmatpush2.msra.mxu0 0.0
    %1336 = vmatprep.mubr.f32.mxu0 0.0
    %1337 = vmatmul.mubr.f32.gmra.mxu0 %v641
    %v1338 = vpop.f32.mrf.mxu0
    %v1339 = vadd.f32 %v1269, %v1338
    %v1340 = vpop.f32.mrf.mxu0
    %1341 = vdwg.mxu0
    %v1342 = vld [vmem:[%s7] sm:$0x1]
    %v1344 = vlaneseq
    %v1345 = vshrl.u32 %v1344, 7
    %v1346 = vsub.s32 0, %v1345
    %v1347 = vrot.slane %v1342, %v1346
    %v1349 = vadd.f32 %v1339, %v1347
    %v1350 = vmax.f32 %v1349, 0.0
    %v1351 = vld [vmem:[%s8] sm:$0xff]
    %v1352 = vld [vmem:[%s8 + $0x8] sm:$0xff]
    %v1353 = vld [vmem:[%s8 + $0x10] sm:$0xff]
    %v1354 = vld [vmem:[%s8 + $0x18] sm:$0xff]
    %v1355 = vld [vmem:[%s8 + $0x20] sm:$0xff]
    %v1356 = vld [vmem:[%s8 + $0x28] sm:$0xff]
    %v1357 = vld [vmem:[%s8 + $0x30] sm:$0xff]
    %v1358 = vld [vmem:[%s8 + $0x38] sm:$0xff]
    %v1359 = vld [vmem:[%s9] sm:$0x1]
    %v1361 = vlaneseq
    %v1362 = vshrl.u32 %v1361, 7
    %v1363 = vsub.s32 0, %v1362
    %v1364 = vrot.slane %v1359, %v1363
    %v1367 = vsel %vm212, %v1350, 0
    %1369 = vmatprep.subr.mxu0 0.0
    %1370 = vmatpush1.msra.mxu0 0.0
    %1371 = vmatprep.subr.mxu0 0.0
    %1372 = vmatpush1.msra.mxu0 0.0
    %1373 = vmatprep.subr.mxu0 0.0
    %1374 = vmatpush1.msra.mxu0 0.0
    %1375 = vmatprep.subr.mxu0 0.0
    %1376 = vmatpush1.msra.mxu0 0.0
    %1377 = vmatprep.subr.mxu0 0.0
    %1378 = vmatpush1.msra.mxu0 0.0
    %1379 = vmatprep.subr.mxu0 0.0
    %1380 = vmatpush1.msra.mxu0 0.0
    %1381 = vmatprep.subr.mxu0 0.0
    %1382 = vmatpush1.msra.mxu0 0.0
    %1383 = vmatprep.subr.mxu0 0.0
    %1384 = vmatpush1.msra.mxu0 0.0
    %1385 = vmatprep.subr.mxu0 0.0
    %1386 = vmatpush1.msra.mxu0 %v1358
    %1387 = vmatprep.subr.mxu0 0.0
    %1388 = vmatpush1.msra.mxu0 %v1357
    %1389 = vmatprep.subr.mxu0 0.0
    %1390 = vmatpush1.msra.mxu0 %v1356
    %1391 = vmatprep.subr.mxu0 0.0
    %1392 = vmatpush1.msra.mxu0 %v1355
    %1393 = vmatprep.subr.mxu0 0.0
    %1394 = vmatpush1.msra.mxu0 %v1354
    %1395 = vmatprep.subr.mxu0 0.0
    %1396 = vmatpush1.msra.mxu0 %v1353
    %1397 = vmatprep.subr.mxu0 0.0
    %1398 = vmatpush1.msra.mxu0 %v1352
    %1399 = vmatprep.subr.mxu0 0.0
    %1400 = vmatpush1.msra.mxu0 %v1351
    %1401 = vmatprep.subr.mxu0 0.0
    %1402 = vmatpush2.msra.mxu0 0.0
    %1403 = vmatprep.subr.mxu0 0.0
    %1404 = vmatpush2.msra.mxu0 0.0
    %1405 = vmatprep.subr.mxu0 0.0
    %1406 = vmatpush2.msra.mxu0 0.0
    %1407 = vmatprep.subr.mxu0 0.0
    %1408 = vmatpush2.msra.mxu0 0.0
    %1409 = vmatprep.subr.mxu0 0.0
    %1410 = vmatpush2.msra.mxu0 0.0
    %1411 = vmatprep.subr.mxu0 0.0
    %1412 = vmatpush2.msra.mxu0 0.0
    %1413 = vmatprep.subr.mxu0 0.0
    %1414 = vmatpush2.msra.mxu0 0.0
    %1415 = vmatprep.subr.mxu0 0.0
    %1416 = vmatpush2.msra.mxu0 0.0
    %1417 = vmatprep.subr.mxu0 0.0
    %1418 = vmatpush2.msra.mxu0 0.0
    %1419 = vmatprep.subr.mxu0 0.0
    %1420 = vmatpush2.msra.mxu0 0.0
    %1421 = vmatprep.subr.mxu0 0.0
    %1422 = vmatpush2.msra.mxu0 0.0
    %1423 = vmatprep.subr.mxu0 0.0
    %1424 = vmatpush2.msra.mxu0 0.0
    %1425 = vmatprep.subr.mxu0 0.0
    %1426 = vmatpush2.msra.mxu0 0.0
    %1427 = vmatprep.subr.mxu0 0.0
    %1428 = vmatpush2.msra.mxu0 0.0
    %1429 = vmatprep.subr.mxu0 0.0
    %1430 = vmatpush2.msra.mxu0 0.0
    %1431 = vmatprep.subr.mxu0 0.0
    %1432 = vmatpush2.msra.mxu0 0.0
    %1433 = vmatprep.mubr.f32.mxu0 0.0
    %1434 = vmatmul.mubr.f32.gmra.mxu0 %v1367
    %v1435 = vpop.f32.mrf.mxu0
    %v1436 = vadd.f32 %v1364, %v1435
    %v1437 = vpop.f32.mrf.mxu0
    %1438 = vdwg.mxu0
    %1439 = vst [vmem:[#allocation7] sm:$0xff] %v1436
    // Predicated region
    $region50: #{tpu_custom_call.1} parent=1 // pred_check
      _
    $region51: #{tpu_custom_call.1} parent=1 // pred_check_branch
      %1441 = sbr.rel (0) target = $region53
    $region52: #{tpu_custom_call.1} parent=1 // pred_region
      %s1443 = ssub.s32 128, 128
      %1444 = vsyncadd [#allocation4], %s1443
      %s1446 = sshll.u32 [#allocation7], 4
      %s1447 = int_to_ptr.vmem [resolvable:$true] %s1446
      %1449 = dma.vmem_to_hbm [thread:$0]  %s1447, 128, %s10, [#allocation4]
    $region53: #{tpu_custom_call.1} parent=1 // pred_fallthru
      _
    // Predicated region
    $region54: #{tpu_custom_call.1} parent=1 // pred_check
      _
    $region55: #{tpu_custom_call.1} parent=1 // pred_check_branch
      %1451 = sbr.rel (0) target = $region57
    $region56: #{tpu_custom_call.1} parent=1 // pred_region
      %1452 = dma.done [#allocation4], 128
    $region57: #{tpu_custom_call.1} parent=1 // pred_fallthru
      _
    %1453 = vsyncpa [#allocation3], 1
    %1454 = vsyncpa [#allocation6], 1
    %1455 = vsyncpa [#allocation4], 1

</llo_original>
